<compile_context>
chip_gen: v6e
topology: v6e:2x2x1
jax: 0.10.0
libtpu: 0.0.40
codegen_flags: <defaults>
</compile_context>

<pallas_src>
import jax
import jax.numpy as jnp
from jax import lax
from jax.experimental import pallas as pl
from jax.experimental.pallas import tpu as pltpu


# ------------------------------ Pallas kernel ------------------------------- #

def _shallownet_fused_kernel(p_ref, weff_ref, beff_ref, pool_ref, w3_ref, b3_ref,
                             o_ref, logp_ref):
    """One batch element, fully in VMEM:
       (folded conv1+conv2) -> square -> avg-pool -> log(clamp) -> conv3 -> log-softmax.

    p_ref   : (W2out, Kdim)  im2col patches of the raw input
    weff_ref: (Kdim, C)      folded conv1+conv2 weights
    beff_ref: (1, C)         folded bias
    pool_ref: (Wp, W2out)    constant 0 / (1/10) averaging matrix
    w3_ref  : (Wp*C, OUT)    conv3 weights, rows ordered (kw, c)
    b3_ref  : (1, OUT)
    o_ref   : (1, OUT)       per-sample log-probabilities
    logp_ref: (Wp, C)        VMEM scratch
    """
    # Folded conv1+conv2 as a single matmul.
    h = (jnp.dot(p_ref[...], weff_ref[...], preferred_element_type=jnp.float32)
         + beff_ref[...])                                            # (W2out, C)
    sq = h * h
    # AvgPool2d((1,10),(1,5)) as a matmul (keeps the 1/10 divisor of AvgPool2d).
    pooled = jnp.dot(pool_ref[...], sq, preferred_element_type=jnp.float32)  # (Wp, C)
    logp_ref[...] = jnp.log(jnp.maximum(pooled, 1e-6))

    # conv3: single output position (Wp == KW3), contraction over (kw, c), done as
    # Wp small accumulated dots on rows loaded from scratch (no in-vreg reshape).
    wp, c = logp_ref.shape
    logits = b3_ref[...]                                             # (1, OUT)
    for kw in range(wp):                                             # static unroll
        logits = logits + jnp.dot(logp_ref[kw:kw + 1, :],
                                  w3_ref[kw * c:(kw + 1) * c, :],
                                  preferred_element_type=jnp.float32)
    # LogSoftmax over the class axis.
    m = jnp.max(logits, axis=-1, keepdims=True)
    lse = jnp.log(jnp.sum(jnp.exp(logits - m), axis=-1, keepdims=True)) + m
    o_ref[...] = logits - lse


def shallownet_fused_call(p, weff_mat, b_eff, pool_mat, w3_mat, b3):
    N, W2out, Kdim = p.shape
    C = weff_mat.shape[1]
    Wp = pool_mat.shape[0]
    OUT = w3_mat.shape[1]
    out = pl.pallas_call(
        _shallownet_fused_kernel,
        out_shape=jax.ShapeDtypeStruct((N, 1, OUT), jnp.float32),
        grid=(N,),
        in_specs=[
            pl.BlockSpec((None, W2out, Kdim), lambda n: (n, 0, 0)),   # per-sample patches
            pl.BlockSpec((Kdim, C), lambda n: (0, 0)),
            pl.BlockSpec((1, C), lambda n: (0, 0)),
            pl.BlockSpec((Wp, W2out), lambda n: (0, 0)),
            pl.BlockSpec((Wp * C, OUT), lambda n: (0, 0)),
            pl.BlockSpec((1, OUT), lambda n: (0, 0)),
        ],
        out_specs=pl.BlockSpec((None, 1, OUT), lambda n: (n, 0, 0)),
        scratch_shapes=[pltpu.VMEM((Wp, C), jnp.float32)],
        compiler_params=pltpu.CompilerParams(
            dimension_semantics=("parallel",)),                       # v7x: 2 TCs
    )(p, weff_mat, b_eff, pool_mat, w3_mat, b3)
    return out.reshape(N, OUT)


# --------------------------- forward pass wrapper --------------------------- #

@jax.jit
def shallownet_forward(x, params):
    """x: (N, H=20, W) float32.  Returns (N, OUT) log-probabilities."""
    W1, b1, W2, b2, W3, b3 = params
    N, H, Wt = x.shape
    O2 = W2.shape[0]                     # 32 channels after conv2
    KW1 = W1.shape[3]                    # 5
    KH2, KW2 = W2.shape[2], W2.shape[3]  # 20, 5
    KW3 = W3.shape[3]                    # 10
    OUT = W3.shape[0]
    pool_k, pool_s = 10, 5

    assert H == KH2, "conv2 kernel height must equal the electrode dimension"

    # ---- fold conv1 into conv2 (no nonlinearity between them) ----
    KWe = KW1 + KW2 - 1                                   # 9
    W1k = W1[:, 0, 0, :]                                  # (Cin, KW1)
    W_eff = jnp.zeros((O2, H, KWe), jnp.float32)
    for kw2 in range(KW2):
        W_eff = W_eff.at[:, :, kw2:kw2 + KW1].add(
            jnp.einsum('ock,cj->okj', W2[:, :, :, kw2], W1k))
    b_eff = b2 + jnp.einsum('ockw,c->o', W2, b1)
    weff_mat = jnp.transpose(W_eff, (1, 2, 0)).reshape(H * KWe, O2)   # ((kh,kw), o)

    # ---- tiny im2col of the raw input (K-dim = H*KWe = 180) ----
    W2out = Wt - KWe + 1
    p = jnp.stack([x[:, :, kw:kw + W2out] for kw in range(KWe)], axis=-1)  # (N,H,W2out,KWe)
    p = jnp.transpose(p, (0, 2, 1, 3)).reshape(N, W2out, H * KWe)

    # ---- constant avg-pool matrix (0 / 1/pool_k) ----
    Wp = (W2out - pool_k) // pool_s + 1
    start = jnp.arange(Wp, dtype=jnp.int32)[:, None] * pool_s
    cols = jnp.arange(W2out, dtype=jnp.int32)[None, :]
    pool_mat = ((cols >= start) & (cols < start + pool_k)).astype(jnp.float32) / pool_k

    # conv3 has a single output position only when Wp == KW3 (holds for Wt=63).
    assert Wp == KW3, f"pooled width {Wp} must equal conv3 kernel width {KW3}"
    w3_mat = jnp.transpose(W3[:, :, 0, :], (2, 1, 0)).reshape(KW3 * O2, OUT)  # rows (kw, c)

    return shallownet_fused_call(p, weff_mat, b_eff.reshape(1, O2),
                                 pool_mat, w3_mat, b3.reshape(1, OUT))


# --------------------------- pure-JAX reference ----------------------------- #

def reference_forward(x, params):
    W1, b1, W2, b2, W3, b3 = params
    xin = x[:, None, :, :]                                       # NCHW
    y = lax.conv(xin, W1, (1, 1), "VALID") + b1[None, :, None, None]
    y = lax.conv(y, W2, (1, 1), "VALID") + b2[None, :, None, None]
    y = y * y
    y = lax.reduce_window(y, 0.0, lax.add, (1, 1, 1, 10), (1, 1, 1, 5), "VALID") / 10.0
    y = jnp.log(jnp.maximum(y, 1e-6))
    y = lax.conv(y, W3, (1, 1), "VALID") + b3[None, :, None, None]
    y = jax.nn.log_softmax(y, axis=1)
    return jnp.squeeze(y)


# ---------------------------------- main ------------------------------------ #

if __name__ == "__main__":
    N, H, Wt = 2, 20, 63       # 20 electrodes (matches conv2 kernel height), 63 timesteps
    OUTPUT = 5                 # number of classes

    key = jax.random.PRNGKey(0)
    k1, k2, k3, k4, k5, k6, kx = jax.random.split(key, 7)

    # Deterministic synthetic parameters (PyTorch Conv2d weight layout: O,I,KH,KW).
    W1 = jax.random.normal(k1, (32, 1, 1, 5), jnp.float32) * 0.2
    b1 = jax.random.normal(k2, (32,), jnp.float32) * 0.1
    W2 = jax.random.normal(k3, (32, 32, 20, 5), jnp.float32) * 0.02
    b2 = jax.random.normal(k4, (32,), jnp.float32) * 0.1
    W3 = jax.random.normal(k5, (OUTPUT, 32, 1, 10), jnp.float32) * 0.05
    b3 = jax.random.normal(k6, (OUTPUT,), jnp.float32) * 0.1
    params = (W1, b1, W2, b2, W3, b3)

    x = jax.random.normal(kx, (N, H, Wt), jnp.float32)

    out = shallownet_forward(x, params)
    out = jax.block_until_ready(out)

    ref = reference_forward(x, params)
    assert out.shape == (N, OUTPUT), out.shape
    assert jnp.allclose(out, ref, rtol=1e-3, atol=1e-3), float(jnp.max(jnp.abs(out - ref)))

    print("KERNEL_OK")
</pallas_src>

<mosaic_0001>
module attributes {stable_mosaic.version = 11 : i64} {
  func.func @_shallownet_fused_kernel(%arg0: i32, %arg1: memref<1x55x180xf32, #tpu.memory_space<vmem>>, %arg2: memref<180x32xf32, #tpu.memory_space<vmem>>, %arg3: memref<1x32xf32, #tpu.memory_space<vmem>>, %arg4: memref<10x55xf32, #tpu.memory_space<vmem>>, %arg5: memref<320x5xf32, #tpu.memory_space<vmem>>, %arg6: memref<1x5xf32, #tpu.memory_space<vmem>>, %arg7: memref<1x1x5xf32, #tpu.memory_space<vmem>>, %arg8: memref<10x32xf32, #tpu.memory_space<vmem>>) attributes {dimension_semantics = [#tpu.dimension_semantics<parallel>], iteration_bounds = array<i64: 2>, scalar_prefetch = 0 : i64, scratch_operands = 1 : i64, tpu.core_type = #tpu.core_type<tc>, window_params = [{transform_indices = @transform_0, window_bounds = array<i64: 1, 55, 180>}, {pipeline_mode = #tpu.pipeline_mode<synchronous>, transform_indices = @transform_1, window_bounds = array<i64: 180, 32>}, {pipeline_mode = #tpu.pipeline_mode<synchronous>, transform_indices = @transform_2, window_bounds = array<i64: 1, 32>}, {pipeline_mode = #tpu.pipeline_mode<synchronous>, transform_indices = @transform_3, window_bounds = array<i64: 10, 55>}, {pipeline_mode = #tpu.pipeline_mode<synchronous>, transform_indices = @transform_4, window_bounds = array<i64: 320, 5>}, {pipeline_mode = #tpu.pipeline_mode<synchronous>, transform_indices = @transform_5, window_bounds = array<i64: 1, 5>}, {transform_indices = @transform_6, window_bounds = array<i64: 1, 1, 5>}]} {
    %c0 = arith.constant 0 : index
    %c0_0 = arith.constant 0 : index
    %c0_1 = arith.constant 0 : index
    %0 = vector.load %arg1[%c0, %c0_0, %c0_1] : memref<1x55x180xf32, #tpu.memory_space<vmem>>, vector<1x55x180xf32>
    %1 = vector.shape_cast %0 : vector<1x55x180xf32> to vector<55x180xf32>
    %c0_2 = arith.constant 0 : index
    %c0_3 = arith.constant 0 : index
    %2 = vector.load %arg2[%c0_2, %c0_3] : memref<180x32xf32, #tpu.memory_space<vmem>>, vector<180x32xf32>
    %cst = arith.constant dense<0.000000e+00> : vector<55x32xf32>
    %3 = tpu.matmul %1, %2, %cst {dimension_numbers = #tpu.dot_dimension_numbers<[1], [0], [0], [1], [0, 0, 1, 1], [], []>} : vector<55x180xf32>, vector<180x32xf32>, vector<55x32xf32> -> vector<55x32xf32>
    %c0_4 = arith.constant 0 : index
    %c0_5 = arith.constant 0 : index
    %4 = vector.load %arg3[%c0_4, %c0_5] : memref<1x32xf32, #tpu.memory_space<vmem>>, vector<1x32xf32>
    %5 = vector.broadcast %4 : vector<1x32xf32> to vector<55x32xf32>
    %6 = arith.addf %3, %5 : vector<55x32xf32>
    %7 = arith.mulf %6, %6 : vector<55x32xf32>
    %c0_6 = arith.constant 0 : index
    %c0_7 = arith.constant 0 : index
    %8 = vector.load %arg4[%c0_6, %c0_7] : memref<10x55xf32, #tpu.memory_space<vmem>>, vector<10x55xf32>
    %cst_8 = arith.constant dense<0.000000e+00> : vector<10x32xf32>
    %9 = tpu.matmul %8, %7, %cst_8 {dimension_numbers = #tpu.dot_dimension_numbers<[1], [0], [0], [1], [0, 0, 1, 1], [], []>} : vector<10x55xf32>, vector<55x32xf32>, vector<10x32xf32> -> vector<10x32xf32>
    %cst_9 = arith.constant 9.99999997E-7 : f32
    %10 = vector.broadcast %cst_9 : f32 to vector<10x32xf32>
    %11 = arith.maximumf %9, %10 : vector<10x32xf32>
    %12 = math.log %11 : vector<10x32xf32>
    %c0_10 = arith.constant 0 : index
    %c0_11 = arith.constant 0 : index
    %13 = vector.load %arg8[%c0_10, %c0_11] : memref<10x32xf32, #tpu.memory_space<vmem>>, vector<10x32xf32>
    tpu.vector_store %arg8[%c0_10, %c0_11], %12 {strides = array<i32>} : memref<10x32xf32, #tpu.memory_space<vmem>>, vector<10x32xf32>,
    %c0_12 = arith.constant 0 : index
    %c0_13 = arith.constant 0 : index
    %14 = vector.load %arg6[%c0_12, %c0_13] : memref<1x5xf32, #tpu.memory_space<vmem>>, vector<1x5xf32>
    %c0_14 = arith.constant 0 : index
    %c0_15 = arith.constant 0 : index
    %15 = vector.load %arg8[%c0_14, %c0_15] : memref<10x32xf32, #tpu.memory_space<vmem>>, vector<1x32xf32>
    %c0_16 = arith.constant 0 : index
    %c0_17 = arith.constant 0 : index
    %16 = vector.load %arg5[%c0_16, %c0_17] : memref<320x5xf32, #tpu.memory_space<vmem>>, vector<32x5xf32>
    %cst_18 = arith.constant dense<0.000000e+00> : vector<1x5xf32>
    %17 = tpu.matmul %15, %16, %cst_18 {dimension_numbers = #tpu.dot_dimension_numbers<[1], [0], [0], [1], [0, 0, 1, 1], [], []>} : vector<1x32xf32>, vector<32x5xf32>, vector<1x5xf32> -> vector<1x5xf32>
    %18 = arith.addf %14, %17 : vector<1x5xf32>
    %c1 = arith.constant 1 : index
    %c0_19 = arith.constant 0 : index
    %19 = vector.load %arg8[%c1, %c0_19] : memref<10x32xf32, #tpu.memory_space<vmem>>, vector<1x32xf32>
    %c32 = arith.constant 32 : index
    %c0_20 = arith.constant 0 : index
    %20 = vector.load %arg5[%c32, %c0_20] : memref<320x5xf32, #tpu.memory_space<vmem>>, vector<32x5xf32>
    %cst_21 = arith.constant dense<0.000000e+00> : vector<1x5xf32>
    %21 = tpu.matmul %19, %20, %cst_21 {dimension_numbers = #tpu.dot_dimension_numbers<[1], [0], [0], [1], [0, 0, 1, 1], [], []>} : vector<1x32xf32>, vector<32x5xf32>, vector<1x5xf32> -> vector<1x5xf32>
    %22 = arith.addf %18, %21 : vector<1x5xf32>
    %c2 = arith.constant 2 : index
    %c0_22 = arith.constant 0 : index
    %23 = vector.load %arg8[%c2, %c0_22] : memref<10x32xf32, #tpu.memory_space<vmem>>, vector<1x32xf32>
    %c64 = arith.constant 64 : index
    %c0_23 = arith.constant 0 : index
    %24 = vector.load %arg5[%c64, %c0_23] : memref<320x5xf32, #tpu.memory_space<vmem>>, vector<32x5xf32>
    %cst_24 = arith.constant dense<0.000000e+00> : vector<1x5xf32>
    %25 = tpu.matmul %23, %24, %cst_24 {dimension_numbers = #tpu.dot_dimension_numbers<[1], [0], [0], [1], [0, 0, 1, 1], [], []>} : vector<1x32xf32>, vector<32x5xf32>, vector<1x5xf32> -> vector<1x5xf32>
    %26 = arith.addf %22, %25 : vector<1x5xf32>
    %c3 = arith.constant 3 : index
    %c0_25 = arith.constant 0 : index
    %27 = vector.load %arg8[%c3, %c0_25] : memref<10x32xf32, #tpu.memory_space<vmem>>, vector<1x32xf32>
    %c96 = arith.constant 96 : index
    %c0_26 = arith.constant 0 : index
    %28 = vector.load %arg5[%c96, %c0_26] : memref<320x5xf32, #tpu.memory_space<vmem>>, vector<32x5xf32>
    %cst_27 = arith.constant dense<0.000000e+00> : vector<1x5xf32>
    %29 = tpu.matmul %27, %28, %cst_27 {dimension_numbers = #tpu.dot_dimension_numbers<[1], [0], [0], [1], [0, 0, 1, 1], [], []>} : vector<1x32xf32>, vector<32x5xf32>, vector<1x5xf32> -> vector<1x5xf32>
    %30 = arith.addf %26, %29 : vector<1x5xf32>
    %c4 = arith.constant 4 : index
    %c0_28 = arith.constant 0 : index
    %31 = vector.load %arg8[%c4, %c0_28] : memref<10x32xf32, #tpu.memory_space<vmem>>, vector<1x32xf32>
    %c128 = arith.constant 128 : index
    %c0_29 = arith.constant 0 : index
    %32 = vector.load %arg5[%c128, %c0_29] : memref<320x5xf32, #tpu.memory_space<vmem>>, vector<32x5xf32>
    %cst_30 = arith.constant dense<0.000000e+00> : vector<1x5xf32>
    %33 = tpu.matmul %31, %32, %cst_30 {dimension_numbers = #tpu.dot_dimension_numbers<[1], [0], [0], [1], [0, 0, 1, 1], [], []>} : vector<1x32xf32>, vector<32x5xf32>, vector<1x5xf32> -> vector<1x5xf32>
    %34 = arith.addf %30, %33 : vector<1x5xf32>
    %c5 = arith.constant 5 : index
    %c0_31 = arith.constant 0 : index
    %35 = vector.load %arg8[%c5, %c0_31] : memref<10x32xf32, #tpu.memory_space<vmem>>, vector<1x32xf32>
    %c160 = arith.constant 160 : index
    %c0_32 = arith.constant 0 : index
    %36 = vector.load %arg5[%c160, %c0_32] : memref<320x5xf32, #tpu.memory_space<vmem>>, vector<32x5xf32>
    %cst_33 = arith.constant dense<0.000000e+00> : vector<1x5xf32>
    %37 = tpu.matmul %35, %36, %cst_33 {dimension_numbers = #tpu.dot_dimension_numbers<[1], [0], [0], [1], [0, 0, 1, 1], [], []>} : vector<1x32xf32>, vector<32x5xf32>, vector<1x5xf32> -> vector<1x5xf32>
    %38 = arith.addf %34, %37 : vector<1x5xf32>
    %c6 = arith.constant 6 : index
    %c0_34 = arith.constant 0 : index
    %39 = vector.load %arg8[%c6, %c0_34] : memref<10x32xf32, #tpu.memory_space<vmem>>, vector<1x32xf32>
    %c192 = arith.constant 192 : index
    %c0_35 = arith.constant 0 : index
    %40 = vector.load %arg5[%c192, %c0_35] : memref<320x5xf32, #tpu.memory_space<vmem>>, vector<32x5xf32>
    %cst_36 = arith.constant dense<0.000000e+00> : vector<1x5xf32>
    %41 = tpu.matmul %39, %40, %cst_36 {dimension_numbers = #tpu.dot_dimension_numbers<[1], [0], [0], [1], [0, 0, 1, 1], [], []>} : vector<1x32xf32>, vector<32x5xf32>, vector<1x5xf32> -> vector<1x5xf32>
    %42 = arith.addf %38, %41 : vector<1x5xf32>
    %c7 = arith.constant 7 : index
    %c0_37 = arith.constant 0 : index
    %43 = vector.load %arg8[%c7, %c0_37] : memref<10x32xf32, #tpu.memory_space<vmem>>, vector<1x32xf32>
    %c224 = arith.constant 224 : index
    %c0_38 = arith.constant 0 : index
    %44 = vector.load %arg5[%c224, %c0_38] : memref<320x5xf32, #tpu.memory_space<vmem>>, vector<32x5xf32>
    %cst_39 = arith.constant dense<0.000000e+00> : vector<1x5xf32>
    %45 = tpu.matmul %43, %44, %cst_39 {dimension_numbers = #tpu.dot_dimension_numbers<[1], [0], [0], [1], [0, 0, 1, 1], [], []>} : vector<1x32xf32>, vector<32x5xf32>, vector<1x5xf32> -> vector<1x5xf32>
    %46 = arith.addf %42, %45 : vector<1x5xf32>
    %c8 = arith.constant 8 : index
    %c0_40 = arith.constant 0 : index
    %47 = vector.load %arg8[%c8, %c0_40] : memref<10x32xf32, #tpu.memory_space<vmem>>, vector<1x32xf32>
    %c256 = arith.constant 256 : index
    %c0_41 = arith.constant 0 : index
    %48 = vector.load %arg5[%c256, %c0_41] : memref<320x5xf32, #tpu.memory_space<vmem>>, vector<32x5xf32>
    %cst_42 = arith.constant dense<0.000000e+00> : vector<1x5xf32>
    %49 = tpu.matmul %47, %48, %cst_42 {dimension_numbers = #tpu.dot_dimension_numbers<[1], [0], [0], [1], [0, 0, 1, 1], [], []>} : vector<1x32xf32>, vector<32x5xf32>, vector<1x5xf32> -> vector<1x5xf32>
    %50 = arith.addf %46, %49 : vector<1x5xf32>
    %c9 = arith.constant 9 : index
    %c0_43 = arith.constant 0 : index
    %51 = vector.load %arg8[%c9, %c0_43] : memref<10x32xf32, #tpu.memory_space<vmem>>, vector<1x32xf32>
    %c288 = arith.constant 288 : index
    %c0_44 = arith.constant 0 : index
    %52 = vector.load %arg5[%c288, %c0_44] : memref<320x5xf32, #tpu.memory_space<vmem>>, vector<32x5xf32>
    %cst_45 = arith.constant dense<0.000000e+00> : vector<1x5xf32>
    %53 = tpu.matmul %51, %52, %cst_45 {dimension_numbers = #tpu.dot_dimension_numbers<[1], [0], [0], [1], [0, 0, 1, 1], [], []>} : vector<1x32xf32>, vector<32x5xf32>, vector<1x5xf32> -> vector<1x5xf32>
    %54 = arith.addf %50, %53 : vector<1x5xf32>
    %cst_46 = arith.constant dense<0xFF800000> : vector<1xf32>
    %55 = vector.multi_reduction <maximumf>, %54, %cst_46 [1] : vector<1x5xf32> to vector<1xf32>
    %56 = vector.shape_cast %55 : vector<1xf32> to vector<1x1xf32>
    %57 = vector.broadcast %56 : vector<1x1xf32> to vector<1x5xf32>
    %58 = arith.subf %54, %57 : vector<1x5xf32>
    %59 = math.exp %58 : vector<1x5xf32>
    %cst_47 = arith.constant dense<0.000000e+00> : vector<1xf32>
    %60 = vector.multi_reduction <add>, %59, %cst_47 [1] : vector<1x5xf32> to vector<1xf32>
    %61 = vector.shape_cast %60 : vector<1xf32> to vector<1x1xf32>
    %62 = math.log %61 : vector<1x1xf32>
    %63 = arith.addf %62, %56 : vector<1x1xf32>
    %64 = vector.broadcast %63 : vector<1x1xf32> to vector<1x5xf32>
    %65 = arith.subf %54, %64 : vector<1x5xf32>
    %c0_48 = arith.constant 0 : index
    %c0_49 = arith.constant 0 : index
    %c0_50 = arith.constant 0 : index
    %66 = vector.load %arg7[%c0_48, %c0_49, %c0_50] : memref<1x1x5xf32, #tpu.memory_space<vmem>>, vector<1x1x5xf32>
    %67 = vector.shape_cast %66 : vector<1x1x5xf32> to vector<1x5xf32>
    %68 = vector.shape_cast %65 : vector<1x5xf32> to vector<1x1x5xf32>
    tpu.vector_store %arg7[%c0_48, %c0_49, %c0_50], %68 {strides = array<i32>} : memref<1x1x5xf32, #tpu.memory_space<vmem>>, vector<1x1x5xf32>,
    return
  }
  func.func @transform_0(%arg0: i32) -> (i32, i32, i32) {
    %c0_i32 = arith.constant 0 : i32
    %c0_i32_0 = arith.constant 0 : i32
    %c0_i32_1 = arith.constant 0 : i32
    return %arg0, %c0_i32, %c0_i32_0 : i32, i32, i32
  }
  func.func @transform_1(%arg0: i32) -> (i32, i32) {
    %c0_i32 = arith.constant 0 : i32
    %c0_i32_0 = arith.constant 0 : i32
    %c0_i32_1 = arith.constant 0 : i32
    return %c0_i32, %c0_i32_0 : i32, i32
  }
  func.func @transform_2(%arg0: i32) -> (i32, i32) {
    %c0_i32 = arith.constant 0 : i32
    %c0_i32_0 = arith.constant 0 : i32
    %c0_i32_1 = arith.constant 0 : i32
    return %c0_i32, %c0_i32_0 : i32, i32
  }
  func.func @transform_3(%arg0: i32) -> (i32, i32) {
    %c0_i32 = arith.constant 0 : i32
    %c0_i32_0 = arith.constant 0 : i32
    %c0_i32_1 = arith.constant 0 : i32
    return %c0_i32, %c0_i32_0 : i32, i32
  }
  func.func @transform_4(%arg0: i32) -> (i32, i32) {
    %c0_i32 = arith.constant 0 : i32
    %c0_i32_0 = arith.constant 0 : i32
    %c0_i32_1 = arith.constant 0 : i32
    return %c0_i32, %c0_i32_0 : i32, i32
  }
  func.func @transform_5(%arg0: i32) -> (i32, i32) {
    %c0_i32 = arith.constant 0 : i32
    %c0_i32_0 = arith.constant 0 : i32
    %c0_i32_1 = arith.constant 0 : i32
    return %c0_i32, %c0_i32_0 : i32, i32
  }
  func.func @transform_6(%arg0: i32) -> (i32, i32, i32) {
    %c0_i32 = arith.constant 0 : i32
    %c0_i32_0 = arith.constant 0 : i32
    %c0_i32_1 = arith.constant 0 : i32
    return %arg0, %c0_i32, %c0_i32_0 : i32, i32, i32
  }
}

</mosaic_0001>

<llo_original>
// kernel: shallownet_forward.1
$region0: #{shallownet_forward.1}
  #allocation0 [shape = 'u32[]', space=smem, size = 0x4, offset = 0x4, fixed_abs, tag = 'smem constant byte address 0x4 - core index']
  #allocation1 [shape = 'u32[144,128]{1,0:T(1,128)}', space=vmem, size = 0x12000, scoped, tag = 'internal scratch']
  #allocation2 [shape = 'f32[10,32]{1,0:T(8,128)}', space=vmem, size = 0x2000, scoped, tag = 'scratch operand']
  %s0 = inlined_call_operand.vmem [shape: f32[2,55,180], index: 0, kind: input, shape index: {}]
  %s1 = inlined_call_operand.vmem [shape: f32[180,32], index: 1, kind: input, shape index: {}]
  %s2 = inlined_call_operand.vmem [shape: f32[1,32], index: 2, kind: input, shape index: {}]
  %s3 = inlined_call_operand.vmem [shape: f32[10,55], index: 3, kind: input, shape index: {}]
  %s4 = inlined_call_operand.vmem [shape: f32[320,5], index: 4, kind: input, shape index: {}]
  %s5 = inlined_call_operand.vmem [shape: f32[1,5], index: 5, kind: input, shape index: {}]
  %s6 = inlined_call_operand.hbm [shape: f32[2,1,5], index: 6, kind: output, shape index: {}]
  %s7 = sld [smem:[#allocation0]]
  $region57: #{shallownet_forward.1} parent=0
    _
  %s9 = ssub.s32 1, %s7
  %s10 = scalar_select 0, %s9, %s7
  $region1: #{shallownet_forward.1} parent=0
    #allocation3 [shape = 'u8[1024]{0}', space=vmem, size = 0x400, scoped, tag = 'output window, operand 0']
    #allocation4 [shape = 's32[2]{0}', space=sflag, size = 0x8, scoped, tag = 'scoped memory for shallownet_forward.1']
    %11 = vsyncpa [#allocation4], 0
    %s12 = scalar_lea.sflag [#allocation4], 1
    %13 = vsyncpa %s12, 0
    loop: start=0, step=1, limit=4
    $region2: #{shallownet_forward.1} parent=1 // loop_pre_header
      _
    $region3: #{shallownet_forward.1} parent=1 // loop_header
      %s15 = sphi 0, %s19
      %p16 = scmp.ge.s32.totalorder %s15, 4
      %s25 = sphi 0, %s27
      %s28 = sphi 0, %s25
      %s29 = sphi 0, %s28
      %s45 = sphi 0, %s29
      %s49 = sphi 0, %s49
      %s51 = sphi 0, %s49
      %s52 = sphi 0, %s51
      %s66 = sphi 0, %s52
      %s70 = sphi 0, %s70
      %s72 = sphi 0, %s70
      %s73 = sphi 0, %s72
      %s87 = sphi 0, %s73
      %s91 = sphi 0, %s91
      %s93 = sphi 0, %s91
      %s94 = sphi 0, %s93
      %s108 = sphi 0, %s94
      %s112 = sphi 0, %s112
      %s114 = sphi 0, %s112
      %s115 = sphi 0, %s114
      %s129 = sphi 0, %s115
      %s133 = sphi 0, %s133
      %s135 = sphi 0, %s133
      %s136 = sphi 0, %s135
      %s150 = sphi 0, %s136
      %s156 = sphi 0, %s158
      %s159 = sphi 0, %s156
      %s160 = sphi 0, %s159
      %s176 = sphi 0, %s160
    $region4: #{shallownet_forward.1} parent=1 // loop_header_branch
      %18 = sbr.rel (%p16) target = $region8
    $region5: #{shallownet_forward.1} parent=1 // loop_body
      %s20 = ssub.s32 %s15, 1
      %s21 = ssub.s32 %s15, 2
      %s22 = sadd.s32 %s15, 1
      %s23 = ssub.s32 %s15, %s22
      %p24 = scmp.eq.s32.totalorder %s23, 0
      %s26 = sadd.s32 %s25, 1
      %s27 = scalar_select %p24, %s25, %s26
      %p30 = pneg %p24
      %p31 = scmp.eq.s32.totalorder %s15, 1
      %p32 = por %p30, %p31
      %p33 = scmp.ne.s32.totalorder %s25, %s28
      %p34 = scmp.eq.s32.totalorder %s15, 0
      %p35 = por %p33, %p34
      %p36 = scmp.ne.s32.totalorder %s25, %s28
      %p37 = scmp.eq.s32.totalorder %s20, 1
      %p38 = por %p36, %p37
      %p39 = scmp.ne.s32.totalorder %s28, %s29
      %p40 = scmp.eq.s32.totalorder %s20, 0
      %p41 = por %p39, %p40
      %p42 = scmp.ne.s32.totalorder %s28, %s29
      %p43 = scmp.eq.s32.totalorder %s21, 1
      %p44 = por %p42, %p43
      %p46 = scmp.ne.s32.totalorder %s29, %s45
      %p47 = scmp.eq.s32.totalorder %s21, 0
      %p48 = por %p46, %p47
      %s50 = sadd.s32 %s49, 1
      %p53 = scmp.eq.s32.totalorder %s15, 1
      %p54 = scmp.ne.s32.totalorder %s49, %s51
      %p55 = scmp.eq.s32.totalorder %s15, 0
      %p56 = por %p54, %p55
      %p57 = scmp.ne.s32.totalorder %s49, %s51
      %p58 = scmp.eq.s32.totalorder %s20, 1
      %p59 = por %p57, %p58
      %p60 = scmp.ne.s32.totalorder %s51, %s52
      %p61 = scmp.eq.s32.totalorder %s20, 0
      %p62 = por %p60, %p61
      %p63 = scmp.ne.s32.totalorder %s51, %s52
      %p64 = scmp.eq.s32.totalorder %s21, 1
      %p65 = por %p63, %p64
      %p67 = scmp.ne.s32.totalorder %s52, %s66
      %p68 = scmp.eq.s32.totalorder %s21, 0
      %p69 = por %p67, %p68
      %s71 = sadd.s32 %s70, 1
      %p74 = scmp.eq.s32.totalorder %s15, 1
      %p75 = scmp.ne.s32.totalorder %s70, %s72
      %p76 = scmp.eq.s32.totalorder %s15, 0
      %p77 = por %p75, %p76
      %p78 = scmp.ne.s32.totalorder %s70, %s72
      %p79 = scmp.eq.s32.totalorder %s20, 1
      %p80 = por %p78, %p79
      %p81 = scmp.ne.s32.totalorder %s72, %s73
      %p82 = scmp.eq.s32.totalorder %s20, 0
      %p83 = por %p81, %p82
      %p84 = scmp.ne.s32.totalorder %s72, %s73
      %p85 = scmp.eq.s32.totalorder %s21, 1
      %p86 = por %p84, %p85
      %p88 = scmp.ne.s32.totalorder %s73, %s87
      %p89 = scmp.eq.s32.totalorder %s21, 0
      %p90 = por %p88, %p89
      %s92 = sadd.s32 %s91, 1
      %p95 = scmp.eq.s32.totalorder %s15, 1
      %p96 = scmp.ne.s32.totalorder %s91, %s93
      %p97 = scmp.eq.s32.totalorder %s15, 0
      %p98 = por %p96, %p97
      %p99 = scmp.ne.s32.totalorder %s91, %s93
      %p100 = scmp.eq.s32.totalorder %s20, 1
      %p101 = por %p99, %p100
      %p102 = scmp.ne.s32.totalorder %s93, %s94
      %p103 = scmp.eq.s32.totalorder %s20, 0
      %p104 = por %p102, %p103
      %p105 = scmp.ne.s32.totalorder %s93, %s94
      %p106 = scmp.eq.s32.totalorder %s21, 1
      %p107 = por %p105, %p106
      %p109 = scmp.ne.s32.totalorder %s94, %s108
      %p110 = scmp.eq.s32.totalorder %s21, 0
      %p111 = por %p109, %p110
      %s113 = sadd.s32 %s112, 1
      %p116 = scmp.eq.s32.totalorder %s15, 1
      %p117 = scmp.ne.s32.totalorder %s112, %s114
      %p118 = scmp.eq.s32.totalorder %s15, 0
      %p119 = por %p117, %p118
      %p120 = scmp.ne.s32.totalorder %s112, %s114
      %p121 = scmp.eq.s32.totalorder %s20, 1
      %p122 = por %p120, %p121
      %p123 = scmp.ne.s32.totalorder %s114, %s115
      %p124 = scmp.eq.s32.totalorder %s20, 0
      %p125 = por %p123, %p124
      %p126 = scmp.ne.s32.totalorder %s114, %s115
      %p127 = scmp.eq.s32.totalorder %s21, 1
      %p128 = por %p126, %p127
      %p130 = scmp.ne.s32.totalorder %s115, %s129
      %p131 = scmp.eq.s32.totalorder %s21, 0
      %p132 = por %p130, %p131
      %s134 = sadd.s32 %s133, 1
      %p137 = scmp.eq.s32.totalorder %s15, 1
      %p138 = scmp.ne.s32.totalorder %s133, %s135
      %p139 = scmp.eq.s32.totalorder %s15, 0
      %p140 = por %p138, %p139
      %p141 = scmp.ne.s32.totalorder %s133, %s135
      %p142 = scmp.eq.s32.totalorder %s20, 1
      %p143 = por %p141, %p142
      %p144 = scmp.ne.s32.totalorder %s135, %s136
      %p145 = scmp.eq.s32.totalorder %s20, 0
      %p146 = por %p144, %p145
      %p147 = scmp.ne.s32.totalorder %s135, %s136
      %p148 = scmp.eq.s32.totalorder %s21, 1
      %p149 = por %p147, %p148
      %p151 = scmp.ne.s32.totalorder %s136, %s150
      %p152 = scmp.eq.s32.totalorder %s21, 0
      %p153 = por %p151, %p152
      %s154 = ssub.s32 %s15, %s22
      %p155 = scmp.eq.s32.totalorder %s154, 0
      %s157 = sadd.s32 %s156, 1
      %s158 = scalar_select %p155, %s156, %s157
      %p161 = pneg %p155
      %p162 = scmp.eq.s32.totalorder %s15, 1
      %p163 = por %p161, %p162
      %p164 = scmp.ne.s32.totalorder %s156, %s159
      %p165 = scmp.eq.s32.totalorder %s15, 0
      %p166 = por %p164, %p165
      %p167 = scmp.ne.s32.totalorder %s156, %s159
      %p168 = scmp.eq.s32.totalorder %s20, 1
      %p169 = por %p167, %p168
      %p170 = scmp.ne.s32.totalorder %s159, %s160
      %p171 = scmp.eq.s32.totalorder %s20, 0
      %p172 = por %p170, %p171
      %p173 = scmp.ne.s32.totalorder %s159, %s160
      %p174 = scmp.eq.s32.totalorder %s21, 1
      %p175 = por %p173, %p174
      %p177 = scmp.ne.s32.totalorder %s160, %s176
      %p178 = scmp.eq.s32.totalorder %s21, 0
      %p179 = por %p177, %p178
      %p180 = scmp.le.s32.totalorder 1, %s15
      %p181 = scmp.lt.s32.totalorder %s15, 3
      %p182 = pnand %p180, %p181
      %p183 = pneg %p182
      // Predicated region
      $region9: #{shallownet_forward.1} parent=5 // pred_check
        _
      $region10: #{shallownet_forward.1} parent=5 // pred_check_branch
        %185 = sbr.rel (%p182) target = $region12
      $region11: #{shallownet_forward.1} parent=5 // pred_region
        %s186 = ssub.s32 %s15, 1
        // Predicated region
        $region13: #{shallownet_forward.1} parent=11 // pred_check
          %p187 = pneg %p62
        $region14: #{shallownet_forward.1} parent=11 // pred_check_branch
          %189 = sbr.rel (%p187) target = $region16
        $region15: #{shallownet_forward.1} parent=11 // pred_region
          _
        $region16: #{shallownet_forward.1} parent=11 // pred_fallthru
          _
        // Predicated region
        $region17: #{shallownet_forward.1} parent=11 // pred_check
          %p190 = pneg %p83
        $region18: #{shallownet_forward.1} parent=11 // pred_check_branch
          %192 = sbr.rel (%p190) target = $region20
        $region19: #{shallownet_forward.1} parent=11 // pred_region
          _
        $region20: #{shallownet_forward.1} parent=11 // pred_fallthru
          _
        // Predicated region
        $region21: #{shallownet_forward.1} parent=11 // pred_check
          %p193 = pneg %p104
        $region22: #{shallownet_forward.1} parent=11 // pred_check_branch
          %195 = sbr.rel (%p193) target = $region24
        $region23: #{shallownet_forward.1} parent=11 // pred_region
          _
        $region24: #{shallownet_forward.1} parent=11 // pred_fallthru
          _
        // Predicated region
        $region25: #{shallownet_forward.1} parent=11 // pred_check
          %p196 = pneg %p125
        $region26: #{shallownet_forward.1} parent=11 // pred_check_branch
          %198 = sbr.rel (%p196) target = $region28
        $region27: #{shallownet_forward.1} parent=11 // pred_region
          _
        $region28: #{shallownet_forward.1} parent=11 // pred_fallthru
          _
        // Predicated region
        $region29: #{shallownet_forward.1} parent=11 // pred_check
          %p199 = pneg %p146
        $region30: #{shallownet_forward.1} parent=11 // pred_check_branch
          %201 = sbr.rel (%p199) target = $region32
        $region31: #{shallownet_forward.1} parent=11 // pred_region
          _
        $region32: #{shallownet_forward.1} parent=11 // pred_fallthru
          _
      $region12: #{shallownet_forward.1} parent=5 // pred_fallthru
        _
      %p202 = scmp.lt.s32.totalorder %s15, 2
      // Predicated region
      $region33: #{shallownet_forward.1} parent=5 // pred_check
        %p203 = pneg %p202
      $region34: #{shallownet_forward.1} parent=5 // pred_check_branch
        %205 = sbr.rel (%p203) target = $region36
      $region35: #{shallownet_forward.1} parent=5 // pred_region
        // Predicated region
        $region37: #{shallownet_forward.1} parent=35 // pred_check
          %p206 = pneg %p35
        $region38: #{shallownet_forward.1} parent=35 // pred_check_branch
          %208 = sbr.rel (%p206) target = $region40
        $region39: #{shallownet_forward.1} parent=35 // pred_region
          %p209 = scmp.lt.s32.totalorder %s15, 1
          %s210 = scalar_select %p209, %s15, 1
          %s211 = smul.addr %s210, 14
          %s212 = smul.addr %s211, 8
          %s213 = scalar_lea.vmem %s0, %s212
        $region40: #{shallownet_forward.1} parent=35 // pred_fallthru
          _
      $region36: #{shallownet_forward.1} parent=5 // pred_fallthru
        _
      %p214 = scmp.le.s32.totalorder 1, %s15
      %p215 = scmp.lt.s32.totalorder %s15, 3
      %p216 = pnand %p214, %p215
      %p217 = pneg %p216
      // Predicated region
      $region41: #{shallownet_forward.1} parent=5 // pred_check
        _
      $region42: #{shallownet_forward.1} parent=5 // pred_check_branch
        %219 = sbr.rel (%p216) target = $region44
      $region43: #{shallownet_forward.1} parent=5 // pred_region
        %s220 = ssub.s32 %s15, 1
        %p221 = scmp.lt.s32.totalorder %s20, 1
        %s222 = scalar_select %p221, %s20, 1
        %s223 = smul.addr %s222, 14
        %s224 = smul.addr %s223, 8
        %s225 = scalar_lea.vmem %s0, %s224
        %p226 = pneg %p41
        %p227 = pneg %p38
        %p228 = pneg %p62
        %p229 = pneg %p59
        %p230 = pneg %p83
        %p231 = pneg %p80
        %p232 = pneg %p104
        %p233 = pneg %p101
        %p234 = pneg %p125
        %p235 = pneg %p122
        %p236 = pneg %p146
        %p237 = pneg %p143
        %p238 = pneg %p172
        %p239 = pneg %p169
        %s240 = sand.u32 %s159, 1
        %s241 = scalar_lea.sflag [#allocation4], %s240
        %s242 = sand.u32 %s159, 1
        %s243 = scalar_lea.vmem [#allocation3], %s242
        %p244 = scmp.lt.s32.totalorder %s20, 1
        %s245 = scalar_select %p244, %s20, 1
        %s246 = smul.addr %s245, 14
        %s247 = smul.addr %s246, 8
        %s248 = scalar_lea.vmem %s0, %s247
        %v249 = vld [vmem:[%s248] sm:$0xff]
        %v250 = vld [vmem:[%s248 + $0x8] sm:$0xff]
        %v251 = vld [vmem:[%s248 + $0x10] sm:$0xff]
        %v252 = vld [vmem:[%s248 + $0x18] sm:$0xff]
        %v253 = vld [vmem:[%s248 + $0x20] sm:$0xff]
        %v254 = vld [vmem:[%s248 + $0x28] sm:$0xff]
        %v255 = vld [vmem:[%s248 + $0x30] sm:$0xff]
        %v256 = vld [vmem:[%s248 + $0x38] sm:$0xff]
        %v257 = vld [vmem:[%s248 + $0x40] sm:$0xff]
        %v258 = vld [vmem:[%s248 + $0x48] sm:$0xff]
        %v259 = vld [vmem:[%s248 + $0x50] sm:$0xff]
        %v260 = vld [vmem:[%s248 + $0x58] sm:$0xff]
        %v261 = vld [vmem:[%s248 + $0x60] sm:$0x7f]
        %v262 = vld [vmem:[%s248 + $0x68] sm:$0x7f]
        %v263 = vld [vmem:[%s1] sm:$0xff]
        %v264 = vld [vmem:[%s1 + $0x8] sm:$0xff]
        %v265 = vld [vmem:[%s1 + $0x10] sm:$0xff]
        %v266 = vld [vmem:[%s1 + $0x18] sm:$0xff]
        %v267 = vld [vmem:[%s1 + $0x20] sm:$0xff]
        %v268 = vld [vmem:[%s1 + $0x28] sm:$0xff]
        %v269 = vld [vmem:[%s1 + $0x30] sm:$0xff]
        %v270 = vld [vmem:[%s1 + $0x38] sm:$0xff]
        %v271 = vld [vmem:[%s1 + $0x40] sm:$0xff]
        %v272 = vld [vmem:[%s1 + $0x48] sm:$0xff]
        %v273 = vld [vmem:[%s1 + $0x50] sm:$0xff]
        %v274 = vld [vmem:[%s1 + $0x58] sm:$0xff]
        %v275 = vld [vmem:[%s1 + $0x60] sm:$0xff]
        %v276 = vld [vmem:[%s1 + $0x68] sm:$0xff]
        %v277 = vld [vmem:[%s1 + $0x70] sm:$0xff]
        %v278 = vld [vmem:[%s1 + $0x78] sm:$0xff]
        %v279 = vld [vmem:[%s1 + $0x80] sm:$0xff]
        %v280 = vld [vmem:[%s1 + $0x88] sm:$0xff]
        %v281 = vld [vmem:[%s1 + $0x90] sm:$0xff]
        %v282 = vld [vmem:[%s1 + $0x98] sm:$0xff]
        %v283 = vld [vmem:[%s1 + $0xa0] sm:$0xff]
        %v284 = vld [vmem:[%s1 + $0xa8] sm:$0xff]
        %v285 = vld [vmem:[%s1 + $0xb0] sm:$0xf]
        %v286 = vld [vmem:[%s2] sm:$0x1]
        %v288 = vlaneseq
        %v289 = vshrl.u32 %v288, 7
        %v290 = vsub.s32 0, %v289
        %v291 = vrot.slane %v286, %v290
        %vm293 = vcmask 424960
        %v295 = vsel %vm293, %v250, 0
        %v298 = vsel %vm293, %v252, 0
        %v301 = vsel %vm293, %v254, 0
        %v304 = vsel %vm293, %v256, 0
        %v307 = vsel %vm293, %v258, 0
        %v310 = vsel %vm293, %v260, 0
        %v313 = vsel %vm293, %v262, 0
        %vm315 = vcmask 1043456
        %v317 = vsel %vm315, %v285, 0
        %319 = vmatprep.subr.mxu0 0.0
        %320 = vmatpush1.msra.mxu0 %v278
        %321 = vmatprep.subr.mxu0 0.0
        %322 = vmatpush1.msra.mxu0 %v277
        %323 = vmatprep.subr.mxu0 0.0
        %324 = vmatpush1.msra.mxu0 %v276
        %325 = vmatprep.subr.mxu0 0.0
        %326 = vmatpush1.msra.mxu0 %v275
        %327 = vmatprep.subr.mxu0 0.0
        %328 = vmatpush1.msra.mxu0 %v274
        %329 = vmatprep.subr.mxu0 0.0
        %330 = vmatpush1.msra.mxu0 %v273
        %331 = vmatprep.subr.mxu0 0.0
        %332 = vmatpush1.msra.mxu0 %v272
        %333 = vmatprep.subr.mxu0 0.0
        %334 = vmatpush1.msra.mxu0 %v271
        %335 = vmatprep.subr.mxu0 0.0
        %336 = vmatpush1.msra.mxu0 %v270
        %337 = vmatprep.subr.mxu0 0.0
        %338 = vmatpush1.msra.mxu0 %v269
        %339 = vmatprep.subr.mxu0 0.0
        %340 = vmatpush1.msra.mxu0 %v268
        %341 = vmatprep.subr.mxu0 0.0
        %342 = vmatpush1.msra.mxu0 %v267
        %343 = vmatprep.subr.mxu0 0.0
        %344 = vmatpush1.msra.mxu0 %v266
        %345 = vmatprep.subr.mxu0 0.0
        %346 = vmatpush1.msra.mxu0 %v265
        %347 = vmatprep.subr.mxu0 0.0
        %348 = vmatpush1.msra.mxu0 %v264
        %349 = vmatprep.subr.mxu0 0.0
        %350 = vmatpush1.msra.mxu0 %v263
        %351 = vmatprep.subr.mxu0 0.0
        %352 = vmatpush2.msra.mxu0 0.0
        %353 = vmatprep.subr.mxu0 0.0
        %354 = vmatpush2.msra.mxu0 0.0
        %355 = vmatprep.subr.mxu0 0.0
        %356 = vmatpush2.msra.mxu0 0.0
        %357 = vmatprep.subr.mxu0 0.0
        %358 = vmatpush2.msra.mxu0 0.0
        %359 = vmatprep.subr.mxu0 0.0
        %360 = vmatpush2.msra.mxu0 0.0
        %361 = vmatprep.subr.mxu0 0.0
        %362 = vmatpush2.msra.mxu0 0.0
        %363 = vmatprep.subr.mxu0 0.0
        %364 = vmatpush2.msra.mxu0 0.0
        %365 = vmatprep.subr.mxu0 0.0
        %366 = vmatpush2.msra.mxu0 0.0
        %367 = vmatprep.subr.mxu0 0.0
        %368 = vmatpush2.msra.mxu0 0.0
        %369 = vmatprep.subr.mxu0 0.0
        %370 = vmatpush2.msra.mxu0 %v317
        %371 = vmatprep.subr.mxu0 0.0
        %372 = vmatpush2.msra.mxu0 %v284
        %373 = vmatprep.subr.mxu0 0.0
        %374 = vmatpush2.msra.mxu0 %v283
        %375 = vmatprep.subr.mxu0 0.0
        %376 = vmatpush2.msra.mxu0 %v282
        %377 = vmatprep.subr.mxu0 0.0
        %378 = vmatpush2.msra.mxu0 %v281
        %379 = vmatprep.subr.mxu0 0.0
        %380 = vmatpush2.msra.mxu0 %v280
        %381 = vmatprep.subr.mxu0 0.0
        %382 = vmatpush2.msra.mxu0 %v279
        %383 = vmatprep.mubr.f32.mxu0 %v295
        %384 = vmatmul.mubr.f32.gmra.mxu0 %v249
        %v385 = vpop.f32.mrf.mxu0
        %v386 = vadd.f32 %v291, %v385
        %v387 = vpop.f32.mrf.mxu0
        %388 = vmatprep.mubr.f32.mxu0 %v298
        %389 = vmatmul.mubr.f32.gmra.mxu0 %v251
        %v390 = vpop.f32.mrf.mxu0
        %v391 = vadd.f32 %v291, %v390
        %v392 = vpop.f32.mrf.mxu0
        %393 = vmatprep.mubr.f32.mxu0 %v301
        %394 = vmatmul.mubr.f32.gmra.mxu0 %v253
        %v395 = vpop.f32.mrf.mxu0
        %v396 = vadd.f32 %v291, %v395
        %v397 = vpop.f32.mrf.mxu0
        %398 = vmatprep.mubr.f32.mxu0 %v304
        %399 = vmatmul.mubr.f32.gmra.mxu0 %v255
        %v400 = vpop.f32.mrf.mxu0
        %v401 = vadd.f32 %v291, %v400
        %v402 = vpop.f32.mrf.mxu0
        %403 = vmatprep.mubr.f32.mxu0 %v307
        %404 = vmatmul.mubr.f32.gmra.mxu0 %v257
        %v405 = vpop.f32.mrf.mxu0
        %v406 = vadd.f32 %v291, %v405
        %v407 = vpop.f32.mrf.mxu0
        %408 = vmatprep.mubr.f32.mxu0 %v310
        %409 = vmatmul.mubr.f32.gmra.mxu0 %v259
        %v410 = vpop.f32.mrf.mxu0
        %v411 = vadd.f32 %v291, %v410
        %v412 = vpop.f32.mrf.mxu0
        %413 = vmatprep.mubr.f32.mxu0 %v313
        %414 = vmatmul.mubr.f32.gmra.mxu0 %v261
        %v415 = vpop.f32.mrf.mxu0
        %v416 = vadd.f32 %v291, %v415
        %v417 = vpop.f32.mrf.mxu0
        %418 = vdwg.mxu0
        %v419 = vmul.f32 %v386, %v386
        %v420 = vmul.f32 %v391, %v391
        %v421 = vmul.f32 %v396, %v396
        %v422 = vmul.f32 %v401, %v401
        %v423 = vmul.f32 %v406, %v406
        %v424 = vmul.f32 %v411, %v411
        %v425 = vmul.f32 %v416, %v416
        %v426 = vld [vmem:[%s3] sm:$0xff]
        %v427 = vld [vmem:[%s3 + $0x8] sm:$0x3]
        %vm428 = vcmask 449536
        %v430 = vsel %vm428, %v426, 0
        %v433 = vsel %vm428, %v427, 0
        %vm435 = vcmask 1046528
        %v437 = vsel %vm435, %v425, 0
        %439 = vmatprep.subr.mxu0 0.0
        %440 = vmatpush1.msra.mxu0 0.0
        %441 = vmatprep.subr.mxu0 0.0
        %442 = vmatpush1.msra.mxu0 0.0
        %443 = vmatprep.subr.mxu0 0.0
        %444 = vmatpush1.msra.mxu0 0.0
        %445 = vmatprep.subr.mxu0 0.0
        %446 = vmatpush1.msra.mxu0 0.0
        %447 = vmatprep.subr.mxu0 0.0
        %448 = vmatpush1.msra.mxu0 0.0
        %449 = vmatprep.subr.mxu0 0.0
        %450 = vmatpush1.msra.mxu0 0.0
        %451 = vmatprep.subr.mxu0 0.0
        %452 = vmatpush1.msra.mxu0 0.0
        %453 = vmatprep.subr.mxu0 0.0
        %454 = vmatpush1.msra.mxu0 0.0
        %455 = vmatprep.subr.mxu0 0.0
        %456 = vmatpush1.msra.mxu0 0.0
        %457 = vmatprep.subr.mxu0 0.0
        %458 = vmatpush1.msra.mxu0 %v437
        %459 = vmatprep.subr.mxu0 0.0
        %460 = vmatpush1.msra.mxu0 %v424
        %461 = vmatprep.subr.mxu0 0.0
        %462 = vmatpush1.msra.mxu0 %v423
        %463 = vmatprep.subr.mxu0 0.0
        %464 = vmatpush1.msra.mxu0 %v422
        %465 = vmatprep.subr.mxu0 0.0
        %466 = vmatpush1.msra.mxu0 %v421
        %467 = vmatprep.subr.mxu0 0.0
        %468 = vmatpush1.msra.mxu0 %v420
        %469 = vmatprep.subr.mxu0 0.0
        %470 = vmatpush1.msra.mxu0 %v419
        %471 = vmatprep.subr.mxu0 0.0
        %472 = vmatpush2.msra.mxu0 0.0
        %473 = vmatprep.subr.mxu0 0.0
        %474 = vmatpush2.msra.mxu0 0.0
        %475 = vmatprep.subr.mxu0 0.0
        %476 = vmatpush2.msra.mxu0 0.0
        %477 = vmatprep.subr.mxu0 0.0
        %478 = vmatpush2.msra.mxu0 0.0
        %479 = vmatprep.subr.mxu0 0.0
        %480 = vmatpush2.msra.mxu0 0.0
        %481 = vmatprep.subr.mxu0 0.0
        %482 = vmatpush2.msra.mxu0 0.0
        %483 = vmatprep.subr.mxu0 0.0
        %484 = vmatpush2.msra.mxu0 0.0
        %485 = vmatprep.subr.mxu0 0.0
        %486 = vmatpush2.msra.mxu0 0.0
        %487 = vmatprep.subr.mxu0 0.0
        %488 = vmatpush2.msra.mxu0 0.0
        %489 = vmatprep.subr.mxu0 0.0
        %490 = vmatpush2.msra.mxu0 0.0
        %491 = vmatprep.subr.mxu0 0.0
        %492 = vmatpush2.msra.mxu0 0.0
        %493 = vmatprep.subr.mxu0 0.0
        %494 = vmatpush2.msra.mxu0 0.0
        %495 = vmatprep.subr.mxu0 0.0
        %496 = vmatpush2.msra.mxu0 0.0
        %497 = vmatprep.subr.mxu0 0.0
        %498 = vmatpush2.msra.mxu0 0.0
        %499 = vmatprep.subr.mxu0 0.0
        %500 = vmatpush2.msra.mxu0 0.0
        %501 = vmatprep.subr.mxu0 0.0
        %502 = vmatpush2.msra.mxu0 0.0
        %503 = vmatprep.mubr.f32.mxu0 0.0
        %504 = vmatmul.mubr.f32.gmra.mxu0 %v430
        %v505 = vpop.f32.mrf.mxu0
        %v506 = vadd.f32 0.0, %v505
        %v507 = vpop.f32.mrf.mxu0
        %508 = vmatprep.mubr.f32.mxu0 0.0
        %509 = vmatmul.mubr.f32.gmra.mxu0 %v433
        %v510 = vpop.f32.mrf.mxu0
        %v511 = vadd.f32 0.0, %v510
        %v512 = vpop.f32.mrf.mxu0
        %513 = vdwg.mxu0
        %v514 = vmax.f32 %v506, 1e-06
        %v515 = vmax.f32 %v511, 1e-06
        %v516 = vlog2.pop %v514
        %v517 = vmul.f32 %v516, 0.6931472
        %v518 = vlog2.pop %v515
        %v519 = vmul.f32 %v518, 0.6931472
        %vm520 = vcmask 261120
        %521 = vst.msk [vmem:[#allocation2] sm:$0xff] %vm520, %v517
        %vm522 = vcmask 254976
        %523 = vst.msk [vmem:[#allocation2 + $0x8] sm:$0x3] %vm522, %v519
        %v524 = vld [vmem:[%s5] sm:$0x1]
        %v525 = vld [vmem:[#allocation2] sm:$0x1]
        %v526 = vld [vmem:[%s4] sm:$0xff]
        %v527 = vld [vmem:[%s4 + $0x8] sm:$0xff]
        %v528 = vld [vmem:[%s4 + $0x10] sm:$0xff]
        %v529 = vld [vmem:[%s4 + $0x18] sm:$0xff]
        %v531 = vsel %vm520, %v525, 0
        %533 = vmatprep.subr.mxu0 0.0
        %534 = vmatpush1.msra.mxu0 0.0
        %535 = vmatprep.subr.mxu0 0.0
        %536 = vmatpush1.msra.mxu0 0.0
        %537 = vmatprep.subr.mxu0 0.0
        %538 = vmatpush1.msra.mxu0 0.0
        %539 = vmatprep.subr.mxu0 0.0
        %540 = vmatpush1.msra.mxu0 0.0
        %541 = vmatprep.subr.mxu0 0.0
        %542 = vmatpush1.msra.mxu0 0.0
        %543 = vmatprep.subr.mxu0 0.0
        %544 = vmatpush1.msra.mxu0 0.0
        %545 = vmatprep.subr.mxu0 0.0
        %546 = vmatpush1.msra.mxu0 0.0
        %547 = vmatprep.subr.mxu0 0.0
        %548 = vmatpush1.msra.mxu0 0.0
        %549 = vmatprep.subr.mxu0 0.0
        %550 = vmatpush1.msra.mxu0 0.0
        %551 = vmatprep.subr.mxu0 0.0
        %552 = vmatpush1.msra.mxu0 0.0
        %553 = vmatprep.subr.mxu0 0.0
        %554 = vmatpush1.msra.mxu0 0.0
        %555 = vmatprep.subr.mxu0 0.0
        %556 = vmatpush1.msra.mxu0 0.0
        %557 = vmatprep.subr.mxu0 0.0
        %558 = vmatpush1.msra.mxu0 %v529
        %559 = vmatprep.subr.mxu0 0.0
        %560 = vmatpush1.msra.mxu0 %v528
        %561 = vmatprep.subr.mxu0 0.0
        %562 = vmatpush1.msra.mxu0 %v527
        %563 = vmatprep.subr.mxu0 0.0
        %564 = vmatpush1.msra.mxu0 %v526
        %565 = vmatprep.subr.mxu0 0.0
        %566 = vmatpush2.msra.mxu0 0.0
        %567 = vmatprep.subr.mxu0 0.0
        %568 = vmatpush2.msra.mxu0 0.0
        %569 = vmatprep.subr.mxu0 0.0
        %570 = vmatpush2.msra.mxu0 0.0
        %571 = vmatprep.subr.mxu0 0.0
        %572 = vmatpush2.msra.mxu0 0.0
        %573 = vmatprep.subr.mxu0 0.0
        %574 = vmatpush2.msra.mxu0 0.0
        %575 = vmatprep.subr.mxu0 0.0
        %576 = vmatpush2.msra.mxu0 0.0
        %577 = vmatprep.subr.mxu0 0.0
        %578 = vmatpush2.msra.mxu0 0.0
        %579 = vmatprep.subr.mxu0 0.0
        %580 = vmatpush2.msra.mxu0 0.0
        %581 = vmatprep.subr.mxu0 0.0
        %582 = vmatpush2.msra.mxu0 0.0
        %583 = vmatprep.subr.mxu0 0.0
        %584 = vmatpush2.msra.mxu0 0.0
        %585 = vmatprep.subr.mxu0 0.0
        %586 = vmatpush2.msra.mxu0 0.0
        %587 = vmatprep.subr.mxu0 0.0
        %588 = vmatpush2.msra.mxu0 0.0
        %589 = vmatprep.subr.mxu0 0.0
        %590 = vmatpush2.msra.mxu0 0.0
        %591 = vmatprep.subr.mxu0 0.0
        %592 = vmatpush2.msra.mxu0 0.0
        %593 = vmatprep.subr.mxu0 0.0
        %594 = vmatpush2.msra.mxu0 0.0
        %595 = vmatprep.subr.mxu0 0.0
        %596 = vmatpush2.msra.mxu0 0.0
        %597 = vmatprep.mubr.f32.mxu0 0.0
        %598 = vmatmul.mubr.f32.gmra.mxu0 %v531
        %v599 = vpop.f32.mrf.mxu0
        %v600 = vadd.f32 0.0, %v599
        %v601 = vpop.f32.mrf.mxu0
        %602 = vdwg.mxu0
        %v603 = vadd.f32 %v524, %v600
        %v604 = vld [vmem:[#allocation2 + $0x1] sm:$0x1]
        %v605 = vld [vmem:[%s4 + $0x20] sm:$0xff]
        %v606 = vld [vmem:[%s4 + $0x28] sm:$0xff]
        %v607 = vld [vmem:[%s4 + $0x30] sm:$0xff]
        %v608 = vld [vmem:[%s4 + $0x38] sm:$0xff]
        %v610 = vsel %vm520, %v604, 0
        %612 = vmatprep.subr.mxu0 0.0
        %613 = vmatpush1.msra.mxu0 0.0
        %614 = vmatprep.subr.mxu0 0.0
        %615 = vmatpush1.msra.mxu0 0.0
        %616 = vmatprep.subr.mxu0 0.0
        %617 = vmatpush1.msra.mxu0 0.0
        %618 = vmatprep.subr.mxu0 0.0
        %619 = vmatpush1.msra.mxu0 0.0
        %620 = vmatprep.subr.mxu0 0.0
        %621 = vmatpush1.msra.mxu0 0.0
        %622 = vmatprep.subr.mxu0 0.0
        %623 = vmatpush1.msra.mxu0 0.0
        %624 = vmatprep.subr.mxu0 0.0
        %625 = vmatpush1.msra.mxu0 0.0
        %626 = vmatprep.subr.mxu0 0.0
        %627 = vmatpush1.msra.mxu0 0.0
        %628 = vmatprep.subr.mxu0 0.0
        %629 = vmatpush1.msra.mxu0 0.0
        %630 = vmatprep.subr.mxu0 0.0
        %631 = vmatpush1.msra.mxu0 0.0
        %632 = vmatprep.subr.mxu0 0.0
        %633 = vmatpush1.msra.mxu0 0.0
        %634 = vmatprep.subr.mxu0 0.0
        %635 = vmatpush1.msra.mxu0 0.0
        %636 = vmatprep.subr.mxu0 0.0
        %637 = vmatpush1.msra.mxu0 %v608
        %638 = vmatprep.subr.mxu0 0.0
        %639 = vmatpush1.msra.mxu0 %v607
        %640 = vmatprep.subr.mxu0 0.0
        %641 = vmatpush1.msra.mxu0 %v606
        %642 = vmatprep.subr.mxu0 0.0
        %643 = vmatpush1.msra.mxu0 %v605
        %644 = vmatprep.subr.mxu0 0.0
        %645 = vmatpush2.msra.mxu0 0.0
        %646 = vmatprep.subr.mxu0 0.0
        %647 = vmatpush2.msra.mxu0 0.0
        %648 = vmatprep.subr.mxu0 0.0
        %649 = vmatpush2.msra.mxu0 0.0
        %650 = vmatprep.subr.mxu0 0.0
        %651 = vmatpush2.msra.mxu0 0.0
        %652 = vmatprep.subr.mxu0 0.0
        %653 = vmatpush2.msra.mxu0 0.0
        %654 = vmatprep.subr.mxu0 0.0
        %655 = vmatpush2.msra.mxu0 0.0
        %656 = vmatprep.subr.mxu0 0.0
        %657 = vmatpush2.msra.mxu0 0.0
        %658 = vmatprep.subr.mxu0 0.0
        %659 = vmatpush2.msra.mxu0 0.0
        %660 = vmatprep.subr.mxu0 0.0
        %661 = vmatpush2.msra.mxu0 0.0
        %662 = vmatprep.subr.mxu0 0.0
        %663 = vmatpush2.msra.mxu0 0.0
        %664 = vmatprep.subr.mxu0 0.0
        %665 = vmatpush2.msra.mxu0 0.0
        %666 = vmatprep.subr.mxu0 0.0
        %667 = vmatpush2.msra.mxu0 0.0
        %668 = vmatprep.subr.mxu0 0.0
        %669 = vmatpush2.msra.mxu0 0.0
        %670 = vmatprep.subr.mxu0 0.0
        %671 = vmatpush2.msra.mxu0 0.0
        %672 = vmatprep.subr.mxu0 0.0
        %673 = vmatpush2.msra.mxu0 0.0
        %674 = vmatprep.subr.mxu0 0.0
        %675 = vmatpush2.msra.mxu0 0.0
        %676 = vmatprep.mubr.f32.mxu0 0.0
        %677 = vmatmul.mubr.f32.gmra.mxu0 %v610
        %v678 = vpop.f32.mrf.mxu0
        %v679 = vadd.f32 0.0, %v678
        %v680 = vpop.f32.mrf.mxu0
        %681 = vdwg.mxu0
        %v682 = vadd.f32 %v603, %v679
        %v683 = vld [vmem:[#allocation2 + $0x2] sm:$0x1]
        %v684 = vld [vmem:[%s4 + $0x40] sm:$0xff]
        %v685 = vld [vmem:[%s4 + $0x48] sm:$0xff]
        %v686 = vld [vmem:[%s4 + $0x50] sm:$0xff]
        %v687 = vld [vmem:[%s4 + $0x58] sm:$0xff]
        %v689 = vsel %vm520, %v683, 0
        %691 = vmatprep.subr.mxu0 0.0
        %692 = vmatpush1.msra.mxu0 0.0
        %693 = vmatprep.subr.mxu0 0.0
        %694 = vmatpush1.msra.mxu0 0.0
        %695 = vmatprep.subr.mxu0 0.0
        %696 = vmatpush1.msra.mxu0 0.0
        %697 = vmatprep.subr.mxu0 0.0
        %698 = vmatpush1.msra.mxu0 0.0
        %699 = vmatprep.subr.mxu0 0.0
        %700 = vmatpush1.msra.mxu0 0.0
        %701 = vmatprep.subr.mxu0 0.0
        %702 = vmatpush1.msra.mxu0 0.0
        %703 = vmatprep.subr.mxu0 0.0
        %704 = vmatpush1.msra.mxu0 0.0
        %705 = vmatprep.subr.mxu0 0.0
        %706 = vmatpush1.msra.mxu0 0.0
        %707 = vmatprep.subr.mxu0 0.0
        %708 = vmatpush1.msra.mxu0 0.0
        %709 = vmatprep.subr.mxu0 0.0
        %710 = vmatpush1.msra.mxu0 0.0
        %711 = vmatprep.subr.mxu0 0.0
        %712 = vmatpush1.msra.mxu0 0.0
        %713 = vmatprep.subr.mxu0 0.0
        %714 = vmatpush1.msra.mxu0 0.0
        %715 = vmatprep.subr.mxu0 0.0
        %716 = vmatpush1.msra.mxu0 %v687
        %717 = vmatprep.subr.mxu0 0.0
        %718 = vmatpush1.msra.mxu0 %v686
        %719 = vmatprep.subr.mxu0 0.0
        %720 = vmatpush1.msra.mxu0 %v685
        %721 = vmatprep.subr.mxu0 0.0
        %722 = vmatpush1.msra.mxu0 %v684
        %723 = vmatprep.subr.mxu0 0.0
        %724 = vmatpush2.msra.mxu0 0.0
        %725 = vmatprep.subr.mxu0 0.0
        %726 = vmatpush2.msra.mxu0 0.0
        %727 = vmatprep.subr.mxu0 0.0
        %728 = vmatpush2.msra.mxu0 0.0
        %729 = vmatprep.subr.mxu0 0.0
        %730 = vmatpush2.msra.mxu0 0.0
        %731 = vmatprep.subr.mxu0 0.0
        %732 = vmatpush2.msra.mxu0 0.0
        %733 = vmatprep.subr.mxu0 0.0
        %734 = vmatpush2.msra.mxu0 0.0
        %735 = vmatprep.subr.mxu0 0.0
        %736 = vmatpush2.msra.mxu0 0.0
        %737 = vmatprep.subr.mxu0 0.0
        %738 = vmatpush2.msra.mxu0 0.0
        %739 = vmatprep.subr.mxu0 0.0
        %740 = vmatpush2.msra.mxu0 0.0
        %741 = vmatprep.subr.mxu0 0.0
        %742 = vmatpush2.msra.mxu0 0.0
        %743 = vmatprep.subr.mxu0 0.0
        %744 = vmatpush2.msra.mxu0 0.0
        %745 = vmatprep.subr.mxu0 0.0
        %746 = vmatpush2.msra.mxu0 0.0
        %747 = vmatprep.subr.mxu0 0.0
        %748 = vmatpush2.msra.mxu0 0.0
        %749 = vmatprep.subr.mxu0 0.0
        %750 = vmatpush2.msra.mxu0 0.0
        %751 = vmatprep.subr.mxu0 0.0
        %752 = vmatpush2.msra.mxu0 0.0
        %753 = vmatprep.subr.mxu0 0.0
        %754 = vmatpush2.msra.mxu0 0.0
        %755 = vmatprep.mubr.f32.mxu0 0.0
        %756 = vmatmul.mubr.f32.gmra.mxu0 %v689
        %v757 = vpop.f32.mrf.mxu0
        %v758 = vadd.f32 0.0, %v757
        %v759 = vpop.f32.mrf.mxu0
        %760 = vdwg.mxu0
        %v761 = vadd.f32 %v682, %v758
        %v762 = vld [vmem:[#allocation2 + $0x3] sm:$0x1]
        %v763 = vld [vmem:[%s4 + $0x60] sm:$0xff]
        %v764 = vld [vmem:[%s4 + $0x68] sm:$0xff]
        %v765 = vld [vmem:[%s4 + $0x70] sm:$0xff]
        %v766 = vld [vmem:[%s4 + $0x78] sm:$0xff]
        %v768 = vsel %vm520, %v762, 0
        %770 = vmatprep.subr.mxu0 0.0
        %771 = vmatpush1.msra.mxu0 0.0
        %772 = vmatprep.subr.mxu0 0.0
        %773 = vmatpush1.msra.mxu0 0.0
        %774 = vmatprep.subr.mxu0 0.0
        %775 = vmatpush1.msra.mxu0 0.0
        %776 = vmatprep.subr.mxu0 0.0
        %777 = vmatpush1.msra.mxu0 0.0
        %778 = vmatprep.subr.mxu0 0.0
        %779 = vmatpush1.msra.mxu0 0.0
        %780 = vmatprep.subr.mxu0 0.0
        %781 = vmatpush1.msra.mxu0 0.0
        %782 = vmatprep.subr.mxu0 0.0
        %783 = vmatpush1.msra.mxu0 0.0
        %784 = vmatprep.subr.mxu0 0.0
        %785 = vmatpush1.msra.mxu0 0.0
        %786 = vmatprep.subr.mxu0 0.0
        %787 = vmatpush1.msra.mxu0 0.0
        %788 = vmatprep.subr.mxu0 0.0
        %789 = vmatpush1.msra.mxu0 0.0
        %790 = vmatprep.subr.mxu0 0.0
        %791 = vmatpush1.msra.mxu0 0.0
        %792 = vmatprep.subr.mxu0 0.0
        %793 = vmatpush1.msra.mxu0 0.0
        %794 = vmatprep.subr.mxu0 0.0
        %795 = vmatpush1.msra.mxu0 %v766
        %796 = vmatprep.subr.mxu0 0.0
        %797 = vmatpush1.msra.mxu0 %v765
        %798 = vmatprep.subr.mxu0 0.0
        %799 = vmatpush1.msra.mxu0 %v764
        %800 = vmatprep.subr.mxu0 0.0
        %801 = vmatpush1.msra.mxu0 %v763
        %802 = vmatprep.subr.mxu0 0.0
        %803 = vmatpush2.msra.mxu0 0.0
        %804 = vmatprep.subr.mxu0 0.0
        %805 = vmatpush2.msra.mxu0 0.0
        %806 = vmatprep.subr.mxu0 0.0
        %807 = vmatpush2.msra.mxu0 0.0
        %808 = vmatprep.subr.mxu0 0.0
        %809 = vmatpush2.msra.mxu0 0.0
        %810 = vmatprep.subr.mxu0 0.0
        %811 = vmatpush2.msra.mxu0 0.0
        %812 = vmatprep.subr.mxu0 0.0
        %813 = vmatpush2.msra.mxu0 0.0
        %814 = vmatprep.subr.mxu0 0.0
        %815 = vmatpush2.msra.mxu0 0.0
        %816 = vmatprep.subr.mxu0 0.0
        %817 = vmatpush2.msra.mxu0 0.0
        %818 = vmatprep.subr.mxu0 0.0
        %819 = vmatpush2.msra.mxu0 0.0
        %820 = vmatprep.subr.mxu0 0.0
        %821 = vmatpush2.msra.mxu0 0.0
        %822 = vmatprep.subr.mxu0 0.0
        %823 = vmatpush2.msra.mxu0 0.0
        %824 = vmatprep.subr.mxu0 0.0
        %825 = vmatpush2.msra.mxu0 0.0
        %826 = vmatprep.subr.mxu0 0.0
        %827 = vmatpush2.msra.mxu0 0.0
        %828 = vmatprep.subr.mxu0 0.0
        %829 = vmatpush2.msra.mxu0 0.0
        %830 = vmatprep.subr.mxu0 0.0
        %831 = vmatpush2.msra.mxu0 0.0
        %832 = vmatprep.subr.mxu0 0.0
        %833 = vmatpush2.msra.mxu0 0.0
        %834 = vmatprep.mubr.f32.mxu0 0.0
        %835 = vmatmul.mubr.f32.gmra.mxu0 %v768
        %v836 = vpop.f32.mrf.mxu0
        %v837 = vadd.f32 0.0, %v836
        %v838 = vpop.f32.mrf.mxu0
        %839 = vdwg.mxu0
        %v840 = vadd.f32 %v761, %v837
        %v841 = vld [vmem:[#allocation2 + $0x4] sm:$0x1]
        %v842 = vld [vmem:[%s4 + $0x80] sm:$0xff]
        %v843 = vld [vmem:[%s4 + $0x88] sm:$0xff]
        %v844 = vld [vmem:[%s4 + $0x90] sm:$0xff]
        %v845 = vld [vmem:[%s4 + $0x98] sm:$0xff]
        %v847 = vsel %vm520, %v841, 0
        %849 = vmatprep.subr.mxu0 0.0
        %850 = vmatpush1.msra.mxu0 0.0
        %851 = vmatprep.subr.mxu0 0.0
        %852 = vmatpush1.msra.mxu0 0.0
        %853 = vmatprep.subr.mxu0 0.0
        %854 = vmatpush1.msra.mxu0 0.0
        %855 = vmatprep.subr.mxu0 0.0
        %856 = vmatpush1.msra.mxu0 0.0
        %857 = vmatprep.subr.mxu0 0.0
        %858 = vmatpush1.msra.mxu0 0.0
        %859 = vmatprep.subr.mxu0 0.0
        %860 = vmatpush1.msra.mxu0 0.0
        %861 = vmatprep.subr.mxu0 0.0
        %862 = vmatpush1.msra.mxu0 0.0
        %863 = vmatprep.subr.mxu0 0.0
        %864 = vmatpush1.msra.mxu0 0.0
        %865 = vmatprep.subr.mxu0 0.0
        %866 = vmatpush1.msra.mxu0 0.0
        %867 = vmatprep.subr.mxu0 0.0
        %868 = vmatpush1.msra.mxu0 0.0
        %869 = vmatprep.subr.mxu0 0.0
        %870 = vmatpush1.msra.mxu0 0.0
        %871 = vmatprep.subr.mxu0 0.0
        %872 = vmatpush1.msra.mxu0 0.0
        %873 = vmatprep.subr.mxu0 0.0
        %874 = vmatpush1.msra.mxu0 %v845
        %875 = vmatprep.subr.mxu0 0.0
        %876 = vmatpush1.msra.mxu0 %v844
        %877 = vmatprep.subr.mxu0 0.0
        %878 = vmatpush1.msra.mxu0 %v843
        %879 = vmatprep.subr.mxu0 0.0
        %880 = vmatpush1.msra.mxu0 %v842
        %881 = vmatprep.subr.mxu0 0.0
        %882 = vmatpush2.msra.mxu0 0.0
        %883 = vmatprep.subr.mxu0 0.0
        %884 = vmatpush2.msra.mxu0 0.0
        %885 = vmatprep.subr.mxu0 0.0
        %886 = vmatpush2.msra.mxu0 0.0
        %887 = vmatprep.subr.mxu0 0.0
        %888 = vmatpush2.msra.mxu0 0.0
        %889 = vmatprep.subr.mxu0 0.0
        %890 = vmatpush2.msra.mxu0 0.0
        %891 = vmatprep.subr.mxu0 0.0
        %892 = vmatpush2.msra.mxu0 0.0
        %893 = vmatprep.subr.mxu0 0.0
        %894 = vmatpush2.msra.mxu0 0.0
        %895 = vmatprep.subr.mxu0 0.0
        %896 = vmatpush2.msra.mxu0 0.0
        %897 = vmatprep.subr.mxu0 0.0
        %898 = vmatpush2.msra.mxu0 0.0
        %899 = vmatprep.subr.mxu0 0.0
        %900 = vmatpush2.msra.mxu0 0.0
        %901 = vmatprep.subr.mxu0 0.0
        %902 = vmatpush2.msra.mxu0 0.0
        %903 = vmatprep.subr.mxu0 0.0
        %904 = vmatpush2.msra.mxu0 0.0
        %905 = vmatprep.subr.mxu0 0.0
        %906 = vmatpush2.msra.mxu0 0.0
        %907 = vmatprep.subr.mxu0 0.0
        %908 = vmatpush2.msra.mxu0 0.0
        %909 = vmatprep.subr.mxu0 0.0
        %910 = vmatpush2.msra.mxu0 0.0
        %911 = vmatprep.subr.mxu0 0.0
        %912 = vmatpush2.msra.mxu0 0.0
        %913 = vmatprep.mubr.f32.mxu0 0.0
        %914 = vmatmul.mubr.f32.gmra.mxu0 %v847
        %v915 = vpop.f32.mrf.mxu0
        %v916 = vadd.f32 0.0, %v915
        %v917 = vpop.f32.mrf.mxu0
        %918 = vdwg.mxu0
        %v919 = vadd.f32 %v840, %v916
        %v920 = vld [vmem:[#allocation2 + $0x5] sm:$0x1]
        %v921 = vld [vmem:[%s4 + $0xa0] sm:$0xff]
        %v922 = vld [vmem:[%s4 + $0xa8] sm:$0xff]
        %v923 = vld [vmem:[%s4 + $0xb0] sm:$0xff]
        %v924 = vld [vmem:[%s4 + $0xb8] sm:$0xff]
        %v926 = vsel %vm520, %v920, 0
        %928 = vmatprep.subr.mxu0 0.0
        %929 = vmatpush1.msra.mxu0 0.0
        %930 = vmatprep.subr.mxu0 0.0
        %931 = vmatpush1.msra.mxu0 0.0
        %932 = vmatprep.subr.mxu0 0.0
        %933 = vmatpush1.msra.mxu0 0.0
        %934 = vmatprep.subr.mxu0 0.0
        %935 = vmatpush1.msra.mxu0 0.0
        %936 = vmatprep.subr.mxu0 0.0
        %937 = vmatpush1.msra.mxu0 0.0
        %938 = vmatprep.subr.mxu0 0.0
        %939 = vmatpush1.msra.mxu0 0.0
        %940 = vmatprep.subr.mxu0 0.0
        %941 = vmatpush1.msra.mxu0 0.0
        %942 = vmatprep.subr.mxu0 0.0
        %943 = vmatpush1.msra.mxu0 0.0
        %944 = vmatprep.subr.mxu0 0.0
        %945 = vmatpush1.msra.mxu0 0.0
        %946 = vmatprep.subr.mxu0 0.0
        %947 = vmatpush1.msra.mxu0 0.0
        %948 = vmatprep.subr.mxu0 0.0
        %949 = vmatpush1.msra.mxu0 0.0
        %950 = vmatprep.subr.mxu0 0.0
        %951 = vmatpush1.msra.mxu0 0.0
        %952 = vmatprep.subr.mxu0 0.0
        %953 = vmatpush1.msra.mxu0 %v924
        %954 = vmatprep.subr.mxu0 0.0
        %955 = vmatpush1.msra.mxu0 %v923
        %956 = vmatprep.subr.mxu0 0.0
        %957 = vmatpush1.msra.mxu0 %v922
        %958 = vmatprep.subr.mxu0 0.0
        %959 = vmatpush1.msra.mxu0 %v921
        %960 = vmatprep.subr.mxu0 0.0
        %961 = vmatpush2.msra.mxu0 0.0
        %962 = vmatprep.subr.mxu0 0.0
        %963 = vmatpush2.msra.mxu0 0.0
        %964 = vmatprep.subr.mxu0 0.0
        %965 = vmatpush2.msra.mxu0 0.0
        %966 = vmatprep.subr.mxu0 0.0
        %967 = vmatpush2.msra.mxu0 0.0
        %968 = vmatprep.subr.mxu0 0.0
        %969 = vmatpush2.msra.mxu0 0.0
        %970 = vmatprep.subr.mxu0 0.0
        %971 = vmatpush2.msra.mxu0 0.0
        %972 = vmatprep.subr.mxu0 0.0
        %973 = vmatpush2.msra.mxu0 0.0
        %974 = vmatprep.subr.mxu0 0.0
        %975 = vmatpush2.msra.mxu0 0.0
        %976 = vmatprep.subr.mxu0 0.0
        %977 = vmatpush2.msra.mxu0 0.0
        %978 = vmatprep.subr.mxu0 0.0
        %979 = vmatpush2.msra.mxu0 0.0
        %980 = vmatprep.subr.mxu0 0.0
        %981 = vmatpush2.msra.mxu0 0.0
        %982 = vmatprep.subr.mxu0 0.0
        %983 = vmatpush2.msra.mxu0 0.0
        %984 = vmatprep.subr.mxu0 0.0
        %985 = vmatpush2.msra.mxu0 0.0
        %986 = vmatprep.subr.mxu0 0.0
        %987 = vmatpush2.msra.mxu0 0.0
        %988 = vmatprep.subr.mxu0 0.0
        %989 = vmatpush2.msra.mxu0 0.0
        %990 = vmatprep.subr.mxu0 0.0
        %991 = vmatpush2.msra.mxu0 0.0
        %992 = vmatprep.mubr.f32.mxu0 0.0
        %993 = vmatmul.mubr.f32.gmra.mxu0 %v926
        %v994 = vpop.f32.mrf.mxu0
        %v995 = vadd.f32 0.0, %v994
        %v996 = vpop.f32.mrf.mxu0
        %997 = vdwg.mxu0
        %v998 = vadd.f32 %v919, %v995
        %v999 = vld [vmem:[#allocation2 + $0x6] sm:$0x1]
        %v1000 = vld [vmem:[%s4 + $0xc0] sm:$0xff]
        %v1001 = vld [vmem:[%s4 + $0xc8] sm:$0xff]
        %v1002 = vld [vmem:[%s4 + $0xd0] sm:$0xff]
        %v1003 = vld [vmem:[%s4 + $0xd8] sm:$0xff]
        %v1005 = vsel %vm520, %v999, 0
        %1007 = vmatprep.subr.mxu0 0.0
        %1008 = vmatpush1.msra.mxu0 0.0
        %1009 = vmatprep.subr.mxu0 0.0
        %1010 = vmatpush1.msra.mxu0 0.0
        %1011 = vmatprep.subr.mxu0 0.0
        %1012 = vmatpush1.msra.mxu0 0.0
        %1013 = vmatprep.subr.mxu0 0.0
        %1014 = vmatpush1.msra.mxu0 0.0
        %1015 = vmatprep.subr.mxu0 0.0
        %1016 = vmatpush1.msra.mxu0 0.0
        %1017 = vmatprep.subr.mxu0 0.0
        %1018 = vmatpush1.msra.mxu0 0.0
        %1019 = vmatprep.subr.mxu0 0.0
        %1020 = vmatpush1.msra.mxu0 0.0
        %1021 = vmatprep.subr.mxu0 0.0
        %1022 = vmatpush1.msra.mxu0 0.0
        %1023 = vmatprep.subr.mxu0 0.0
        %1024 = vmatpush1.msra.mxu0 0.0
        %1025 = vmatprep.subr.mxu0 0.0
        %1026 = vmatpush1.msra.mxu0 0.0
        %1027 = vmatprep.subr.mxu0 0.0
        %1028 = vmatpush1.msra.mxu0 0.0
        %1029 = vmatprep.subr.mxu0 0.0
        %1030 = vmatpush1.msra.mxu0 0.0
        %1031 = vmatprep.subr.mxu0 0.0
        %1032 = vmatpush1.msra.mxu0 %v1003
        %1033 = vmatprep.subr.mxu0 0.0
        %1034 = vmatpush1.msra.mxu0 %v1002
        %1035 = vmatprep.subr.mxu0 0.0
        %1036 = vmatpush1.msra.mxu0 %v1001
        %1037 = vmatprep.subr.mxu0 0.0
        %1038 = vmatpush1.msra.mxu0 %v1000
        %1039 = vmatprep.subr.mxu0 0.0
        %1040 = vmatpush2.msra.mxu0 0.0
        %1041 = vmatprep.subr.mxu0 0.0
        %1042 = vmatpush2.msra.mxu0 0.0
        %1043 = vmatprep.subr.mxu0 0.0
        %1044 = vmatpush2.msra.mxu0 0.0
        %1045 = vmatprep.subr.mxu0 0.0
        %1046 = vmatpush2.msra.mxu0 0.0
        %1047 = vmatprep.subr.mxu0 0.0
        %1048 = vmatpush2.msra.mxu0 0.0
        %1049 = vmatprep.subr.mxu0 0.0
        %1050 = vmatpush2.msra.mxu0 0.0
        %1051 = vmatprep.subr.mxu0 0.0
        %1052 = vmatpush2.msra.mxu0 0.0
        %1053 = vmatprep.subr.mxu0 0.0
        %1054 = vmatpush2.msra.mxu0 0.0
        %1055 = vmatprep.subr.mxu0 0.0
        %1056 = vmatpush2.msra.mxu0 0.0
        %1057 = vmatprep.subr.mxu0 0.0
        %1058 = vmatpush2.msra.mxu0 0.0
        %1059 = vmatprep.subr.mxu0 0.0
        %1060 = vmatpush2.msra.mxu0 0.0
        %1061 = vmatprep.subr.mxu0 0.0
        %1062 = vmatpush2.msra.mxu0 0.0
        %1063 = vmatprep.subr.mxu0 0.0
        %1064 = vmatpush2.msra.mxu0 0.0
        %1065 = vmatprep.subr.mxu0 0.0
        %1066 = vmatpush2.msra.mxu0 0.0
        %1067 = vmatprep.subr.mxu0 0.0
        %1068 = vmatpush2.msra.mxu0 0.0
        %1069 = vmatprep.subr.mxu0 0.0
        %1070 = vmatpush2.msra.mxu0 0.0
        %1071 = vmatprep.mubr.f32.mxu0 0.0
        %1072 = vmatmul.mubr.f32.gmra.mxu0 %v1005
        %v1073 = vpop.f32.mrf.mxu0
        %v1074 = vadd.f32 0.0, %v1073
        %v1075 = vpop.f32.mrf.mxu0
        %1076 = vdwg.mxu0
        %v1077 = vadd.f32 %v998, %v1074
        %v1078 = vld [vmem:[#allocation2 + $0x7] sm:$0x1]
        %v1079 = vld [vmem:[%s4 + $0xe0] sm:$0xff]
        %v1080 = vld [vmem:[%s4 + $0xe8] sm:$0xff]
        %v1081 = vld [vmem:[%s4 + $0xf0] sm:$0xff]
        %v1082 = vld [vmem:[%s4 + $0xf8] sm:$0xff]
        %v1084 = vsel %vm520, %v1078, 0
        %1086 = vmatprep.subr.mxu0 0.0
        %1087 = vmatpush1.msra.mxu0 0.0
        %1088 = vmatprep.subr.mxu0 0.0
        %1089 = vmatpush1.msra.mxu0 0.0
        %1090 = vmatprep.subr.mxu0 0.0
        %1091 = vmatpush1.msra.mxu0 0.0
        %1092 = vmatprep.subr.mxu0 0.0
        %1093 = vmatpush1.msra.mxu0 0.0
        %1094 = vmatprep.subr.mxu0 0.0
        %1095 = vmatpush1.msra.mxu0 0.0
        %1096 = vmatprep.subr.mxu0 0.0
        %1097 = vmatpush1.msra.mxu0 0.0
        %1098 = vmatprep.subr.mxu0 0.0
        %1099 = vmatpush1.msra.mxu0 0.0
        %1100 = vmatprep.subr.mxu0 0.0
        %1101 = vmatpush1.msra.mxu0 0.0
        %1102 = vmatprep.subr.mxu0 0.0
        %1103 = vmatpush1.msra.mxu0 0.0
        %1104 = vmatprep.subr.mxu0 0.0
        %1105 = vmatpush1.msra.mxu0 0.0
        %1106 = vmatprep.subr.mxu0 0.0
        %1107 = vmatpush1.msra.mxu0 0.0
        %1108 = vmatprep.subr.mxu0 0.0
        %1109 = vmatpush1.msra.mxu0 0.0
        %1110 = vmatprep.subr.mxu0 0.0
        %1111 = vmatpush1.msra.mxu0 %v1082
        %1112 = vmatprep.subr.mxu0 0.0
        %1113 = vmatpush1.msra.mxu0 %v1081
        %1114 = vmatprep.subr.mxu0 0.0
        %1115 = vmatpush1.msra.mxu0 %v1080
        %1116 = vmatprep.subr.mxu0 0.0
        %1117 = vmatpush1.msra.mxu0 %v1079
        %1118 = vmatprep.subr.mxu0 0.0
        %1119 = vmatpush2.msra.mxu0 0.0
        %1120 = vmatprep.subr.mxu0 0.0
        %1121 = vmatpush2.msra.mxu0 0.0
        %1122 = vmatprep.subr.mxu0 0.0
        %1123 = vmatpush2.msra.mxu0 0.0
        %1124 = vmatprep.subr.mxu0 0.0
        %1125 = vmatpush2.msra.mxu0 0.0
        %1126 = vmatprep.subr.mxu0 0.0
        %1127 = vmatpush2.msra.mxu0 0.0
        %1128 = vmatprep.subr.mxu0 0.0
        %1129 = vmatpush2.msra.mxu0 0.0
        %1130 = vmatprep.subr.mxu0 0.0
        %1131 = vmatpush2.msra.mxu0 0.0
        %1132 = vmatprep.subr.mxu0 0.0
        %1133 = vmatpush2.msra.mxu0 0.0
        %1134 = vmatprep.subr.mxu0 0.0
        %1135 = vmatpush2.msra.mxu0 0.0
        %1136 = vmatprep.subr.mxu0 0.0
        %1137 = vmatpush2.msra.mxu0 0.0
        %1138 = vmatprep.subr.mxu0 0.0
        %1139 = vmatpush2.msra.mxu0 0.0
        %1140 = vmatprep.subr.mxu0 0.0
        %1141 = vmatpush2.msra.mxu0 0.0
        %1142 = vmatprep.subr.mxu0 0.0
        %1143 = vmatpush2.msra.mxu0 0.0
        %1144 = vmatprep.subr.mxu0 0.0
        %1145 = vmatpush2.msra.mxu0 0.0
        %1146 = vmatprep.subr.mxu0 0.0
        %1147 = vmatpush2.msra.mxu0 0.0
        %1148 = vmatprep.subr.mxu0 0.0
        %1149 = vmatpush2.msra.mxu0 0.0
        %1150 = vmatprep.mubr.f32.mxu0 0.0
        %1151 = vmatmul.mubr.f32.gmra.mxu0 %v1084
        %v1152 = vpop.f32.mrf.mxu0
        %v1153 = vadd.f32 0.0, %v1152
        %v1154 = vpop.f32.mrf.mxu0
        %1155 = vdwg.mxu0
        %v1156 = vadd.f32 %v1077, %v1153
        %v1157 = vld [vmem:[#allocation2 + $0x8] sm:$0x1]
        %v1158 = vld [vmem:[%s4 + $0x100] sm:$0xff]
        %v1159 = vld [vmem:[%s4 + $0x108] sm:$0xff]
        %v1160 = vld [vmem:[%s4 + $0x110] sm:$0xff]
        %v1161 = vld [vmem:[%s4 + $0x118] sm:$0xff]
        %v1163 = vsel %vm520, %v1157, 0
        %1165 = vmatprep.subr.mxu0 0.0
        %1166 = vmatpush1.msra.mxu0 0.0
        %1167 = vmatprep.subr.mxu0 0.0
        %1168 = vmatpush1.msra.mxu0 0.0
        %1169 = vmatprep.subr.mxu0 0.0
        %1170 = vmatpush1.msra.mxu0 0.0
        %1171 = vmatprep.subr.mxu0 0.0
        %1172 = vmatpush1.msra.mxu0 0.0
        %1173 = vmatprep.subr.mxu0 0.0
        %1174 = vmatpush1.msra.mxu0 0.0
        %1175 = vmatprep.subr.mxu0 0.0
        %1176 = vmatpush1.msra.mxu0 0.0
        %1177 = vmatprep.subr.mxu0 0.0
        %1178 = vmatpush1.msra.mxu0 0.0
        %1179 = vmatprep.subr.mxu0 0.0
        %1180 = vmatpush1.msra.mxu0 0.0
        %1181 = vmatprep.subr.mxu0 0.0
        %1182 = vmatpush1.msra.mxu0 0.0
        %1183 = vmatprep.subr.mxu0 0.0
        %1184 = vmatpush1.msra.mxu0 0.0
        %1185 = vmatprep.subr.mxu0 0.0
        %1186 = vmatpush1.msra.mxu0 0.0
        %1187 = vmatprep.subr.mxu0 0.0
        %1188 = vmatpush1.msra.mxu0 0.0
        %1189 = vmatprep.subr.mxu0 0.0
        %1190 = vmatpush1.msra.mxu0 %v1161
        %1191 = vmatprep.subr.mxu0 0.0
        %1192 = vmatpush1.msra.mxu0 %v1160
        %1193 = vmatprep.subr.mxu0 0.0
        %1194 = vmatpush1.msra.mxu0 %v1159
        %1195 = vmatprep.subr.mxu0 0.0
        %1196 = vmatpush1.msra.mxu0 %v1158
        %1197 = vmatprep.subr.mxu0 0.0
        %1198 = vmatpush2.msra.mxu0 0.0
        %1199 = vmatprep.subr.mxu0 0.0
        %1200 = vmatpush2.msra.mxu0 0.0
        %1201 = vmatprep.subr.mxu0 0.0
        %1202 = vmatpush2.msra.mxu0 0.0
        %1203 = vmatprep.subr.mxu0 0.0
        %1204 = vmatpush2.msra.mxu0 0.0
        %1205 = vmatprep.subr.mxu0 0.0
        %1206 = vmatpush2.msra.mxu0 0.0
        %1207 = vmatprep.subr.mxu0 0.0
        %1208 = vmatpush2.msra.mxu0 0.0
        %1209 = vmatprep.subr.mxu0 0.0
        %1210 = vmatpush2.msra.mxu0 0.0
        %1211 = vmatprep.subr.mxu0 0.0
        %1212 = vmatpush2.msra.mxu0 0.0
        %1213 = vmatprep.subr.mxu0 0.0
        %1214 = vmatpush2.msra.mxu0 0.0
        %1215 = vmatprep.subr.mxu0 0.0
        %1216 = vmatpush2.msra.mxu0 0.0
        %1217 = vmatprep.subr.mxu0 0.0
        %1218 = vmatpush2.msra.mxu0 0.0
        %1219 = vmatprep.subr.mxu0 0.0
        %1220 = vmatpush2.msra.mxu0 0.0
        %1221 = vmatprep.subr.mxu0 0.0
        %1222 = vmatpush2.msra.mxu0 0.0
        %1223 = vmatprep.subr.mxu0 0.0
        %1224 = vmatpush2.msra.mxu0 0.0
        %1225 = vmatprep.subr.mxu0 0.0
        %1226 = vmatpush2.msra.mxu0 0.0
        %1227 = vmatprep.subr.mxu0 0.0
        %1228 = vmatpush2.msra.mxu0 0.0
        %1229 = vmatprep.mubr.f32.mxu0 0.0
        %1230 = vmatmul.mubr.f32.gmra.mxu0 %v1163
        %v1231 = vpop.f32.mrf.mxu0
        %v1232 = vadd.f32 0.0, %v1231
        %v1233 = vpop.f32.mrf.mxu0
        %1234 = vdwg.mxu0
        %v1235 = vadd.f32 %v1156, %v1232
        %v1236 = vld [vmem:[#allocation2 + $0x9] sm:$0x1]
        %v1237 = vld [vmem:[%s4 + $0x120] sm:$0xff]
        %v1238 = vld [vmem:[%s4 + $0x128] sm:$0xff]
        %v1239 = vld [vmem:[%s4 + $0x130] sm:$0xff]
        %v1240 = vld [vmem:[%s4 + $0x138] sm:$0xff]
        %v1242 = vsel %vm520, %v1236, 0
        %1244 = vmatprep.subr.mxu0 0.0
        %1245 = vmatpush1.msra.mxu0 0.0
        %1246 = vmatprep.subr.mxu0 0.0
        %1247 = vmatpush1.msra.mxu0 0.0
        %1248 = vmatprep.subr.mxu0 0.0
        %1249 = vmatpush1.msra.mxu0 0.0
        %1250 = vmatprep.subr.mxu0 0.0
        %1251 = vmatpush1.msra.mxu0 0.0
        %1252 = vmatprep.subr.mxu0 0.0
        %1253 = vmatpush1.msra.mxu0 0.0
        %1254 = vmatprep.subr.mxu0 0.0
        %1255 = vmatpush1.msra.mxu0 0.0
        %1256 = vmatprep.subr.mxu0 0.0
        %1257 = vmatpush1.msra.mxu0 0.0
        %1258 = vmatprep.subr.mxu0 0.0
        %1259 = vmatpush1.msra.mxu0 0.0
        %1260 = vmatprep.subr.mxu0 0.0
        %1261 = vmatpush1.msra.mxu0 0.0
        %1262 = vmatprep.subr.mxu0 0.0
        %1263 = vmatpush1.msra.mxu0 0.0
        %1264 = vmatprep.subr.mxu0 0.0
        %1265 = vmatpush1.msra.mxu0 0.0
        %1266 = vmatprep.subr.mxu0 0.0
        %1267 = vmatpush1.msra.mxu0 0.0
        %1268 = vmatprep.subr.mxu0 0.0
        %1269 = vmatpush1.msra.mxu0 %v1240
        %1270 = vmatprep.subr.mxu0 0.0
        %1271 = vmatpush1.msra.mxu0 %v1239
        %1272 = vmatprep.subr.mxu0 0.0
        %1273 = vmatpush1.msra.mxu0 %v1238
        %1274 = vmatprep.subr.mxu0 0.0
        %1275 = vmatpush1.msra.mxu0 %v1237
        %1276 = vmatprep.subr.mxu0 0.0
        %1277 = vmatpush2.msra.mxu0 0.0
        %1278 = vmatprep.subr.mxu0 0.0
        %1279 = vmatpush2.msra.mxu0 0.0
        %1280 = vmatprep.subr.mxu0 0.0
        %1281 = vmatpush2.msra.mxu0 0.0
        %1282 = vmatprep.subr.mxu0 0.0
        %1283 = vmatpush2.msra.mxu0 0.0
        %1284 = vmatprep.subr.mxu0 0.0
        %1285 = vmatpush2.msra.mxu0 0.0
        %1286 = vmatprep.subr.mxu0 0.0
        %1287 = vmatpush2.msra.mxu0 0.0
        %1288 = vmatprep.subr.mxu0 0.0
        %1289 = vmatpush2.msra.mxu0 0.0
        %1290 = vmatprep.subr.mxu0 0.0
        %1291 = vmatpush2.msra.mxu0 0.0
        %1292 = vmatprep.subr.mxu0 0.0
        %1293 = vmatpush2.msra.mxu0 0.0
        %1294 = vmatprep.subr.mxu0 0.0
        %1295 = vmatpush2.msra.mxu0 0.0
        %1296 = vmatprep.subr.mxu0 0.0
        %1297 = vmatpush2.msra.mxu0 0.0
        %1298 = vmatprep.subr.mxu0 0.0
        %1299 = vmatpush2.msra.mxu0 0.0
        %1300 = vmatprep.subr.mxu0 0.0
        %1301 = vmatpush2.msra.mxu0 0.0
        %1302 = vmatprep.subr.mxu0 0.0
        %1303 = vmatpush2.msra.mxu0 0.0
        %1304 = vmatprep.subr.mxu0 0.0
        %1305 = vmatpush2.msra.mxu0 0.0
        %1306 = vmatprep.subr.mxu0 0.0
        %1307 = vmatpush2.msra.mxu0 0.0
        %1308 = vmatprep.mubr.f32.mxu0 0.0
        %1309 = vmatmul.mubr.f32.gmra.mxu0 %v1242
        %v1310 = vpop.f32.mrf.mxu0
        %v1311 = vadd.f32 0.0, %v1310
        %v1312 = vpop.f32.mrf.mxu0
        %1313 = vdwg.mxu0
        %v1314 = vadd.f32 %v1235, %v1311
        %vm1315 = vcmask 32768
        %v1316 = vsel %vm1315, %v1314, -inf
        %1317 = vmax.xlane.f32.xlu0 %v1316
        %v1318 = vpop.xlane.xlu0 %1317
        %v1319 = vsub.f32 %v1314, %v1318
        %v1320 = vmul.f32 %v1319, 1.442695
        %v1321 = vpow.pop %v1320
        %v1322 = vsel %vm1315, %v1321, 0.0
        %1323 = vadd.xlane.f32.xlu0 %v1322
        %v1324 = vpop.xlane.xlu0 %1323
        %v1325 = vlog2.pop %v1324
        %v1326 = vmul.f32 %v1325, 0.6931472
        %v1327 = vadd.f32 %v1326, %v1318
        %v1328 = vsub.f32 %v1314, %v1327
        %1329 = vst.msk [vmem:[%s243] sm:$0x1] %vm1315, %v1328
        %s1330 = sand.u32 %s159, 1
        %s1331 = scalar_lea.sflag [#allocation4], %s1330
        %s1332 = sand.u32 %s159, 1
        %s1333 = scalar_lea.vmem [#allocation3], %s1332
        // Predicated region
        $region45: #{shallownet_forward.1} parent=43 // pred_check
          %p1334 = pneg %p169
        $region46: #{shallownet_forward.1} parent=43 // pred_check_branch
          %1336 = sbr.rel (%p1334) target = $region48
        $region47: #{shallownet_forward.1} parent=43 // pred_region
          %s1338 = ssub.s32 16, 16
          %1339 = vsyncadd %s1331, %s1338
          %s1340 = smul.addr %s20, 16
          %s1341 = scalar_lea.hbm %s6, %s1340
          %s1343 = sshll.u32 %s1333, 4
          %s1344 = int_to_ptr.vmem [resolvable:$true] %s1343
          %1346 = dma.vmem_to_hbm [thread:$0]  %s1344, 16, %s1341, %s1331
        $region48: #{shallownet_forward.1} parent=43 // pred_fallthru
          _
      $region44: #{shallownet_forward.1} parent=5 // pred_fallthru
        _
      %p1347 = scmp.le.s32.totalorder 2, %s15
      // Predicated region
      $region49: #{shallownet_forward.1} parent=5 // pred_check
        %p1348 = pneg %p1347
      $region50: #{shallownet_forward.1} parent=5 // pred_check_branch
        %1350 = sbr.rel (%p1348) target = $region52
      $region51: #{shallownet_forward.1} parent=5 // pred_region
        %s1351 = ssub.s32 %s15, 2
        // Predicated region
        $region53: #{shallownet_forward.1} parent=51 // pred_check
          %p1352 = pneg %p175
        $region54: #{shallownet_forward.1} parent=51 // pred_check_branch
          %1354 = sbr.rel (%p1352) target = $region56
        $region55: #{shallownet_forward.1} parent=51 // pred_region
          %s1355 = sand.u32 %s160, 1
          %s1356 = scalar_lea.sflag [#allocation4], %s1355
          %s1357 = sand.u32 %s160, 1
          %s1358 = scalar_lea.vmem [#allocation3], %s1357
          %1359 = dma.done %s1356, 16
        $region56: #{shallownet_forward.1} parent=51 // pred_fallthru
          _
      $region52: #{shallownet_forward.1} parent=5 // pred_fallthru
        _
    $region6: #{shallownet_forward.1} parent=1 // loop_footer
      %s19 = sadd.s32 1, %s15
    $region7: #{shallownet_forward.1} parent=1 // loop_footer_branch
      %14 = sbr.rel target = $region3
    $region8: #{shallownet_forward.1} parent=1 // loop_exit
      _
    %1360 = vsyncpa [#allocation4], 1
    %s1361 = scalar_lea.sflag [#allocation4], 1
    %1362 = vsyncpa %s1361, 1

</llo_original>
